<compile_context>
chip_gen: v7x
topology: tpu7x:2x2x1
jax: 0.10.0
libtpu: 0.0.40
codegen_flags: <defaults>
</compile_context>

<pallas_src>
import functools

import jax
import jax.numpy as jnp
import numpy as np
from jax.experimental import pallas as pl
from jax.experimental.pallas import tpu as pltpu


def _round_up(x, m):
    return ((x + m - 1) // m) * m


def attention_cell_kernel(h_ref, c_ref, src_ref, tgt_ref,
                          w_i2h_ref, w_hcomb_ref, b_h2h_ref, w_score_ref,
                          w_ih_ctx_ref, w_ih_tgt_ref, b_lstm_ref,
                          h_out_ref, c_out_ref, alpha_ref,
                          *, context_on_mxu):
    Bb, L, C = src_ref.shape          # batch tile, seq len, src_dim (static)
    Hg = h_ref.shape[1]               # lane-padded hidden width (Hg % 128 == 0)

    h = h_ref[...]                    # [Bb, Hg] bf16 (MXU operand)
    c = c_ref[...]                    # [Bb, Hg] f32  (cell state stays f32)
    src = src_ref[...]                # [Bb, L, C] bf16
    tgt = tgt_ref[...]                # [Bb, E] bf16

    # --- attention feature projection: fold batch into the MXU M dim --------
    # src_features = i2h(src):  [Bb*L, C] @ [C, Hg] -> [Bb*L, Hg]  (f32 acc)
    src_2d = src.reshape(Bb * L, C)
    src_feat = jnp.dot(src_2d, w_i2h_ref[...],
                       preferred_element_type=jnp.float32).reshape(Bb, L, Hg)

    # --- single fused h-driven matmul: [Bb, Hg] @ [Hg, Hg + 4Hg] ------------
    h_all = jnp.dot(h, w_hcomb_ref[...], preferred_element_type=jnp.float32)
    proj = h_all[:, :Hg] + b_h2h_ref[...]          # h2h(h)          [Bb, Hg]
    h_gates = h_all[:, Hg:]                        # h @ W_hh (LSTM) [Bb, 4Hg]
    # (both slices are 128-lane aligned because Hg % 128 == 0)

    # --- attention logits + softmax over L (lane axis) ----------------------
    t = jnp.tanh(src_feat + proj[:, None, :])                       # [Bb, L, Hg]
    logit = jnp.sum(t * w_score_ref[...][None, :, :], axis=-1)      # [Bb, L]
    m = jnp.max(logit, axis=-1, keepdims=True)                      # kept for safety
    e = jnp.exp(logit - m)
    denom = jnp.sum(e, axis=-1, keepdims=True)
    alpha = e * pl.reciprocal(denom, approx=True)                   # EUP slot
    alpha_ref[...] = alpha                                          # lane-dense store

    # --- context = alpha^T @ src  (per batch row) ---------------------------
    if context_on_mxu:
        # Large L: ride the (idle) MXU instead of VPU multiply + XLU reduce.
        a_b = alpha.astype(src.dtype)[:, None, :]                   # [Bb, 1, L]
        context = jnp.einsum('bql,blc->bqc', a_b, src,
                             preferred_element_type=jnp.float32)[:, 0, :]
    else:
        # Small L: VPU multiply + sublane reduce beats an M=1 batched matmul.
        context = jnp.sum(alpha[:, :, None] * src.astype(jnp.float32), axis=1)

    # --- LSTMCell gates (no in-kernel concat; W_ih pre-split host-side) -----
    gates = (jnp.dot(context.astype(jnp.bfloat16), w_ih_ctx_ref[...],
                     preferred_element_type=jnp.float32)
             + jnp.dot(tgt, w_ih_tgt_ref[...],
                       preferred_element_type=jnp.float32)
             + h_gates + b_lstm_ref[...])                           # [Bb, 4Hg]

    # Gate slices are vreg-aligned (multiples of Hg = multiple of 128 lanes).
    i_g = jax.nn.sigmoid(gates[:, 0 * Hg:1 * Hg])
    f_g = jax.nn.sigmoid(gates[:, 1 * Hg:2 * Hg])
    g_g = jnp.tanh(gates[:, 2 * Hg:3 * Hg])
    o_g = jax.nn.sigmoid(gates[:, 3 * Hg:4 * Hg])

    c_new = f_g * c + i_g * g_g         # padded lanes stay exactly 0
    h_new = o_g * jnp.tanh(c_new)
    h_out_ref[...] = h_new
    c_out_ref[...] = c_new


def _choose_block_b(B, L, C, E, Hg):
    """Largest batch tile (multiple of 16, divisor of B) inside a VMEM budget.

    Big tiles fill the MXU M dimension and amortize the ~0.35us per-grid-step
    overhead; the cap keeps (tiles x 2 pipeline buffers) inside a conservative
    activation budget (v7x has only 64 MiB VMEM), and B >= 16 keeps >= 2 tiles
    so the 'parallel' batch axis can shard across both v7x TensorCores.
    """
    if B <= 8:
        return B
    in_row = L * C * 2 + E * 2 + Hg * 2 + Hg * 4        # bf16 src/tgt/h, f32 c
    out_row = 2 * Hg * 4 + L * 4                        # f32 h/c out, f32 alpha
    bytes_per_row = 2 * (in_row + out_row)              # double-buffered pipeline
    act_budget = 24 << 20
    cap = min(512, act_budget // max(bytes_per_row, 1), B // 2)
    cap = max(16, cap - cap % 16)
    block_b = 0
    for d in range(16, cap + 1, 16):                    # 16: bf16 sublane packing
        if B % d == 0:
            block_b = d
    return block_b if block_b else B                    # fall back: one full tile


def _vmem_limit_bytes(block_b, L, C, E, Hg):
    """Explicit scoped-VMEM request sized from tiles + weights (clamped to chip)."""
    weight_bytes = ((C * Hg + 5 * Hg * Hg + (C + E) * 4 * Hg) * 2   # bf16 weights
                    + (2 * Hg + 4 * Hg) * 4)                        # f32 biases/score
    act_bytes = 2 * block_b * (L * C * 2 + E * 2 + Hg * 2 + Hg * 4)
    out_bytes = 2 * block_b * (2 * Hg * 4 + L * 4)
    est = 2 * weight_bytes + act_bytes + out_bytes + (4 << 20)      # + compiler scratch
    try:
        cap = int(pltpu.get_tpu_info().vmem_capacity_bytes) * 3 // 4
    except Exception:
        cap = 48 << 20                                  # v7x: 64 MiB physical VMEM
    return min(max(est, 32 << 20), cap)


def _const_spec(shape, single_buffer):
    """BlockSpec for a grid-constant weight; single-buffered when supported."""
    index_map = lambda i: (0,) * len(shape)
    if single_buffer:
        try:
            return pl.BlockSpec(shape, index_map, pipeline_mode=pl.Buffered(1))
        except Exception:       # older jax without pipeline_mode / Buffered
            pass
    return pl.BlockSpec(shape, index_map)


def _make_call(B, L, C, E, Hg, block_b, nb, single_buffer_weights,
               context_on_mxu, vmem_limit):
    kernel = functools.partial(attention_cell_kernel,
                               context_on_mxu=context_on_mxu)
    wspec = lambda shape: _const_spec(shape, single_buffer_weights)
    return pl.pallas_call(
        kernel,
        out_shape=(
            jax.ShapeDtypeStruct((B, Hg), jnp.float32),   # h_new (lane-padded)
            jax.ShapeDtypeStruct((B, Hg), jnp.float32),   # c_new (lane-padded)
            jax.ShapeDtypeStruct((B, L), jnp.float32),    # alpha (lane-dense)
        ),
        grid_spec=pltpu.PrefetchScalarGridSpec(
            num_scalar_prefetch=0,
            grid=(nb,),
            in_specs=[
                pl.BlockSpec((block_b, Hg), lambda i: (i, 0)),        # h_prev (bf16)
                pl.BlockSpec((block_b, Hg), lambda i: (i, 0)),        # c_prev (f32)
                pl.BlockSpec((block_b, L, C), lambda i: (i, 0, 0)),   # src (bf16)
                pl.BlockSpec((block_b, E), lambda i: (i, 0)),         # tgt (bf16)
                wspec((C, Hg)),           # w_i2h                (bf16, transposed)
                wspec((Hg, 5 * Hg)),      # [w_h2h | W_hh] fused (bf16, transposed)
                wspec((1, Hg)),           # b_h2h                (f32)
                wspec((1, Hg)),           # w_score row vector   (f32)
                wspec((C, 4 * Hg)),       # W_ih context half    (bf16, transposed)
                wspec((E, 4 * Hg)),       # W_ih tgt half        (bf16, transposed)
                wspec((1, 4 * Hg)),       # b_ih + b_hh          (f32)
            ],
            out_specs=[
                pl.BlockSpec((block_b, Hg), lambda i: (i, 0)),
                pl.BlockSpec((block_b, Hg), lambda i: (i, 0)),
                pl.BlockSpec((block_b, L), lambda i: (i, 0)),
            ],
        ),
        compiler_params=pltpu.CompilerParams(
            dimension_semantics=("parallel",),
            vmem_limit_bytes=vmem_limit,
        ),
    )


def attention_cell(h_prev, c_prev, src, tgt, params, block_b=None):
    B, L, C = src.shape
    H = h_prev.shape[1]
    E = tgt.shape[1]
    Hg = _round_up(H, 128)              # lane-align every hidden/gate block
    pad_h = Hg - H
    f32, bf16 = jnp.float32, jnp.bfloat16

    w_i2h, w_h2h, b_h2h, w_score, w_ih, w_hh, b_lstm = params

    # ---- host-side weight prep (layout plumbing; hoist out of any decode
    #      loop in real use).  Each H-wide gate block is zero-padded to Hg so
    #      in-kernel slices are 128-lane aligned; the padding is numerically
    #      exact (padded lanes stay 0).  MXU operands are cast to bf16. ------
    w_i2h_p = jnp.pad(w_i2h, ((0, 0), (0, pad_h))).astype(bf16)            # [C, Hg]
    w_h2h_p = jnp.pad(w_h2h, ((0, pad_h), (0, pad_h)))                     # [Hg, Hg]
    w_hh_p = jnp.pad(w_hh.reshape(H, 4, H),
                     ((0, pad_h), (0, 0), (0, pad_h))).reshape(Hg, 4 * Hg)
    w_hcomb = jnp.concatenate([w_h2h_p, w_hh_p], axis=1).astype(bf16)      # [Hg, 5Hg]
    b_h2h_p = jnp.pad(b_h2h, ((0, 0), (0, pad_h))).astype(f32)             # [1, Hg]
    w_score_p = jnp.pad(w_score, ((0, 0), (0, pad_h))).astype(f32)         # [1, Hg]
    w_ih_p = jnp.pad(w_ih.reshape(C + E, 4, H),
                     ((0, 0), (0, 0), (0, pad_h))).reshape(C + E, 4 * Hg)
    w_ih_ctx = w_ih_p[:C].astype(bf16)                                     # [C, 4Hg]
    w_ih_tgt = w_ih_p[C:].astype(bf16)                                     # [E, 4Hg]
    b_lstm_p = jnp.pad(b_lstm.reshape(1, 4, H),
                       ((0, 0), (0, 0), (0, pad_h))).reshape(1, 4 * Hg).astype(f32)

    # Activations: bf16 MXU operands; cell state c stays f32.
    h_in = jnp.pad(h_prev, ((0, 0), (0, pad_h))).astype(bf16)
    c_in = jnp.pad(c_prev, ((0, 0), (0, pad_h))).astype(f32)
    src_in = src.astype(bf16)
    tgt_in = tgt.astype(bf16)

    if block_b is None:
        block_b = _choose_block_b(B, L, C, E, Hg)
    assert B % block_b == 0
    nb = B // block_b

    context_on_mxu = L >= 128           # large L: weighted sum rides the MXU
    vmem_limit = _vmem_limit_bytes(block_b, L, C, E, Hg)

    def run(single_buffer_weights):
        call = _make_call(B, L, C, E, Hg, block_b, nb, single_buffer_weights,
                          context_on_mxu, vmem_limit)
        return call(h_in, c_in, src_in, tgt_in,
                    w_i2h_p, w_hcomb, b_h2h_p, w_score_p,
                    w_ih_ctx, w_ih_tgt, b_lstm_p)

    try:
        h_new, c_new, alpha = run(True)     # single-buffer grid-constant weights
    except Exception:
        h_new, c_new, alpha = run(False)    # fall back to default double-buffering

    # Un-pad the hidden width and match the module's alpha shape [B, L, 1]
    # (free slices/reshape outside the kernel; in-kernel stores stay lane-dense).
    return h_new[:, :H], c_new[:, :H], alpha[..., None]


def attention_cell_ref(h_prev, c_prev, src, tgt, params, matmul_dtype=None):
    """Pure-JAX reference matching the PyTorch forward semantics.

    matmul_dtype=None reproduces the module in f32; matmul_dtype=jnp.bfloat16
    mirrors the kernel's bf16 MXU-operand rounding (f32 accumulation).
    """
    w_i2h, w_h2h, b_h2h, w_score, w_ih, w_hh, b_lstm = params
    B, L, C = src.shape
    H = h_prev.shape[1]
    f32 = jnp.float32
    lo = (lambda x: x) if matmul_dtype is None else (lambda x: x.astype(matmul_dtype))

    src_feat = jnp.einsum('blc,ch->blh', lo(src), lo(w_i2h),
                          preferred_element_type=f32)
    proj = (jnp.dot(lo(h_prev), lo(w_h2h), preferred_element_type=f32)
            + b_h2h)[:, None, :]
    logit = jnp.sum(jnp.tanh(src_feat + proj) * w_score[None, :, :],
                    axis=-1, keepdims=True)                     # [B, L, 1]
    alpha = jax.nn.softmax(logit, axis=1)
    if matmul_dtype is not None and L >= 128:
        context = jnp.einsum('blo,blc->bc', lo(alpha), lo(src),
                             preferred_element_type=f32)
    else:
        context = jnp.einsum('blo,blc->bc', alpha, lo(src).astype(f32),
                             preferred_element_type=f32)
    gates = (jnp.dot(lo(context), lo(w_ih[:C]), preferred_element_type=f32)
             + jnp.dot(lo(tgt), lo(w_ih[C:]), preferred_element_type=f32)
             + jnp.dot(lo(h_prev), lo(w_hh), preferred_element_type=f32)
             + b_lstm)
    i_g = jax.nn.sigmoid(gates[:, 0 * H:1 * H])
    f_g = jax.nn.sigmoid(gates[:, 1 * H:2 * H])
    g_g = jnp.tanh(gates[:, 2 * H:3 * H])
    o_g = jax.nn.sigmoid(gates[:, 3 * H:4 * H])
    c_new = f_g * c_prev + i_g * g_g
    h_new = o_g * jnp.tanh(c_new)
    return h_new, c_new, alpha


if __name__ == "__main__":
    B, L, C, H, E = 2, 8, 32, 32, 32

    key = jax.random.PRNGKey(0)
    ks = jax.random.split(key, 11)

    # Deterministic "module parameters" (nn.Linear / nn.LSTMCell shapes),
    # stored pre-transposed to [in, out].
    w_i2h = 0.1 * jax.random.normal(ks[0], (C, H), jnp.float32)          # i2h (no bias)
    w_h2h = 0.1 * jax.random.normal(ks[1], (H, H), jnp.float32)          # h2h weight
    b_h2h = 0.1 * jax.random.normal(ks[2], (1, H), jnp.float32)          # h2h bias
    w_score = 0.1 * jax.random.normal(ks[3], (1, H), jnp.float32)        # score (no bias)
    w_ih = 0.1 * jax.random.normal(ks[4], (C + E, 4 * H), jnp.float32)   # LSTM W_ih^T
    w_hh = 0.1 * jax.random.normal(ks[5], (H, 4 * H), jnp.float32)       # LSTM W_hh^T
    b_lstm = 0.1 * jax.random.normal(ks[6], (1, 4 * H), jnp.float32)     # b_ih + b_hh
    params = (w_i2h, w_h2h, b_h2h, w_score, w_ih, w_hh, b_lstm)

    # Inputs: prev_hidden = (h, c), src [B, L, C], tgt [B, E]
    h_prev = jax.random.normal(ks[7], (B, H), jnp.float32)
    c_prev = jax.random.normal(ks[8], (B, H), jnp.float32)
    src = jax.random.normal(ks[9], (B, L, C), jnp.float32)
    tgt = jax.random.normal(ks[10], (B, E), jnp.float32)

    h_new, c_new, alpha = attention_cell(h_prev, c_prev, src, tgt, params)
    jax.block_until_ready((h_new, c_new, alpha))

    # Tight check vs a reference that mirrors the kernel's bf16 MXU operands
    # (residual difference: approx EUP reciprocal + accumulation order).
    h_m, c_m, a_m = attention_cell_ref(h_prev, c_prev, src, tgt, params,
                                       matmul_dtype=jnp.bfloat16)
    np.testing.assert_allclose(np.asarray(h_new), np.asarray(h_m), rtol=3e-3, atol=3e-3)
    np.testing.assert_allclose(np.asarray(c_new), np.asarray(c_m), rtol=3e-3, atol=3e-3)
    np.testing.assert_allclose(np.asarray(alpha), np.asarray(a_m), rtol=3e-3, atol=3e-3)

    # Looser sanity check vs the exact f32 module semantics (bounds the bf16
    # MXU-operand rounding that the perf review asked for on v6e/v7x).
    h_f, c_f, a_f = attention_cell_ref(h_prev, c_prev, src, tgt, params)
    np.testing.assert_allclose(np.asarray(h_new), np.asarray(h_f), rtol=5e-2, atol=5e-2)
    np.testing.assert_allclose(np.asarray(c_new), np.asarray(c_f), rtol=5e-2, atol=5e-2)
    np.testing.assert_allclose(np.asarray(alpha), np.asarray(a_f), rtol=5e-2, atol=5e-2)

    print("KERNEL_OK")
</pallas_src>

<mosaic_0001>
module attributes {stable_mosaic.version = 11 : i64} {
  func.func @attention_cell_kernel(%arg0: i32, %arg1: memref<2x128xbf16, #tpu.memory_space<vmem>>, %arg2: memref<2x128xf32, #tpu.memory_space<vmem>>, %arg3: memref<2x8x32xbf16, #tpu.memory_space<vmem>>, %arg4: memref<2x32xbf16, #tpu.memory_space<vmem>>, %arg5: memref<32x128xbf16, #tpu.memory_space<vmem>>, %arg6: memref<128x640xbf16, #tpu.memory_space<vmem>>, %arg7: memref<1x128xf32, #tpu.memory_space<vmem>>, %arg8: memref<1x128xf32, #tpu.memory_space<vmem>>, %arg9: memref<32x512xbf16, #tpu.memory_space<vmem>>, %arg10: memref<32x512xbf16, #tpu.memory_space<vmem>>, %arg11: memref<1x512xf32, #tpu.memory_space<vmem>>, %arg12: memref<2x128xf32, #tpu.memory_space<vmem>>, %arg13: memref<2x128xf32, #tpu.memory_space<vmem>>, %arg14: memref<2x8xf32, #tpu.memory_space<vmem>>) attributes {dimension_semantics = [#tpu.dimension_semantics<parallel>], iteration_bounds = array<i64: 1>, scalar_prefetch = 0 : i64, scratch_operands = 0 : i64, tpu.core_type = #tpu.core_type<tc>, window_params = [{transform_indices = @transform_0, window_bounds = array<i64: 2, 128>}, {transform_indices = @transform_1, window_bounds = array<i64: 2, 128>}, {transform_indices = @transform_2, window_bounds = array<i64: 2, 8, 32>}, {transform_indices = @transform_3, window_bounds = array<i64: 2, 32>}, {pipeline_mode = #tpu.pipeline_mode<synchronous>, transform_indices = @transform_4, window_bounds = array<i64: 32, 128>}, {pipeline_mode = #tpu.pipeline_mode<synchronous>, transform_indices = @transform_5, window_bounds = array<i64: 128, 640>}, {pipeline_mode = #tpu.pipeline_mode<synchronous>, transform_indices = @transform_6, window_bounds = array<i64: 1, 128>}, {pipeline_mode = #tpu.pipeline_mode<synchronous>, transform_indices = @transform_7, window_bounds = array<i64: 1, 128>}, {pipeline_mode = #tpu.pipeline_mode<synchronous>, transform_indices = @transform_8, window_bounds = array<i64: 32, 512>}, {pipeline_mode = #tpu.pipeline_mode<synchronous>, transform_indices = @transform_9, window_bounds = array<i64: 32, 512>}, {pipeline_mode = #tpu.pipeline_mode<synchronous>, transform_indices = @transform_10, window_bounds = array<i64: 1, 512>}, {transform_indices = @transform_11, window_bounds = array<i64: 2, 128>}, {transform_indices = @transform_12, window_bounds = array<i64: 2, 128>}, {transform_indices = @transform_13, window_bounds = array<i64: 2, 8>}]} {
    %c0 = arith.constant 0 : index
    %c0_0 = arith.constant 0 : index
    %0 = vector.load %arg1[%c0, %c0_0] : memref<2x128xbf16, #tpu.memory_space<vmem>>, vector<2x128xbf16>
    %c0_1 = arith.constant 0 : index
    %c0_2 = arith.constant 0 : index
    %1 = vector.load %arg2[%c0_1, %c0_2] : memref<2x128xf32, #tpu.memory_space<vmem>>, vector<2x128xf32>
    %c0_3 = arith.constant 0 : index
    %c0_4 = arith.constant 0 : index
    %c0_5 = arith.constant 0 : index
    %2 = vector.load %arg3[%c0_3, %c0_4, %c0_5] : memref<2x8x32xbf16, #tpu.memory_space<vmem>>, vector<2x8x32xbf16>
    %c0_6 = arith.constant 0 : index
    %c0_7 = arith.constant 0 : index
    %3 = vector.load %arg4[%c0_6, %c0_7] : memref<2x32xbf16, #tpu.memory_space<vmem>>, vector<2x32xbf16>
    %4 = vector.shape_cast %2 : vector<2x8x32xbf16> to vector<16x32xbf16>
    %c0_8 = arith.constant 0 : index
    %c0_9 = arith.constant 0 : index
    %5 = vector.load %arg5[%c0_8, %c0_9] : memref<32x128xbf16, #tpu.memory_space<vmem>>, vector<32x128xbf16>
    %cst = arith.constant dense<0.000000e+00> : vector<16x128xf32>
    %6 = tpu.matmul %4, %5, %cst {dimension_numbers = #tpu.dot_dimension_numbers<[1], [0], [0], [1], [0, 0, 1, 1], [], []>} : vector<16x32xbf16>, vector<32x128xbf16>, vector<16x128xf32> -> vector<16x128xf32>
    %7 = vector.shape_cast %6 : vector<16x128xf32> to vector<2x8x128xf32>
    %c0_10 = arith.constant 0 : index
    %c0_11 = arith.constant 0 : index
    %8 = vector.load %arg6[%c0_10, %c0_11] : memref<128x640xbf16, #tpu.memory_space<vmem>>, vector<128x640xbf16>
    %cst_12 = arith.constant dense<0.000000e+00> : vector<2x640xf32>
    %9 = tpu.matmul %0, %8, %cst_12 {dimension_numbers = #tpu.dot_dimension_numbers<[1], [0], [0], [1], [0, 0, 1, 1], [], []>} : vector<2x128xbf16>, vector<128x640xbf16>, vector<2x640xf32> -> vector<2x640xf32>
    %10 = vector.extract_strided_slice %9 {offsets = [0, 0], sizes = [2, 128], strides = [1, 1]} : vector<2x640xf32> to vector<2x128xf32>
    %c0_13 = arith.constant 0 : index
    %c0_14 = arith.constant 0 : index
    %11 = vector.load %arg7[%c0_13, %c0_14] : memref<1x128xf32, #tpu.memory_space<vmem>>, vector<1x128xf32>
    %12 = vector.broadcast %11 : vector<1x128xf32> to vector<2x128xf32>
    %13 = arith.addf %10, %12 : vector<2x128xf32>
    %14 = vector.extract_strided_slice %9 {offsets = [0, 128], sizes = [2, 512], strides = [1, 1]} : vector<2x640xf32> to vector<2x512xf32>
    %15 = vector.shape_cast %13 : vector<2x128xf32> to vector<2x1x128xf32>
    %16 = vector.broadcast %15 : vector<2x1x128xf32> to vector<2x8x128xf32>
    %17 = arith.addf %7, %16 : vector<2x8x128xf32>
    %18 = math.tanh %17 : vector<2x8x128xf32>
    %c0_15 = arith.constant 0 : index
    %c0_16 = arith.constant 0 : index
    %19 = vector.load %arg8[%c0_15, %c0_16] : memref<1x128xf32, #tpu.memory_space<vmem>>, vector<1x128xf32>
    %20 = vector.shape_cast %19 : vector<1x128xf32> to vector<1x1x128xf32>
    %21 = vector.broadcast %20 : vector<1x1x128xf32> to vector<2x8x128xf32>
    %22 = arith.mulf %18, %21 : vector<2x8x128xf32>
    %cst_17 = arith.constant dense<0.000000e+00> : vector<2x8xf32>
    %23 = vector.multi_reduction <add>, %22, %cst_17 [2] : vector<2x8x128xf32> to vector<2x8xf32>
    %cst_18 = arith.constant dense<0xFF800000> : vector<2xf32>
    %24 = vector.multi_reduction <maximumf>, %23, %cst_18 [1] : vector<2x8xf32> to vector<2xf32>
    %25 = vector.shape_cast %24 : vector<2xf32> to vector<2x1xf32>
    %26 = vector.broadcast %25 : vector<2x1xf32> to vector<2x8xf32>
    %27 = arith.subf %23, %26 : vector<2x8xf32>
    %28 = math.exp %27 : vector<2x8xf32>
    %cst_19 = arith.constant dense<0.000000e+00> : vector<2xf32>
    %29 = vector.multi_reduction <add>, %28, %cst_19 [1] : vector<2x8xf32> to vector<2xf32>
    %30 = vector.shape_cast %29 : vector<2xf32> to vector<2x1xf32>
    %31 = tpu.reciprocal %30 {approx = true} : vector<2x1xf32> -> vector<2x1xf32>
    %32 = vector.broadcast %31 : vector<2x1xf32> to vector<2x8xf32>
    %33 = arith.mulf %28, %32 : vector<2x8xf32>
    %c0_20 = arith.constant 0 : index
    %c0_21 = arith.constant 0 : index
    %34 = vector.load %arg14[%c0_20, %c0_21] : memref<2x8xf32, #tpu.memory_space<vmem>>, vector<2x8xf32>
    tpu.vector_store %arg14[%c0_20, %c0_21], %33 {strides = array<i32>} : memref<2x8xf32, #tpu.memory_space<vmem>>, vector<2x8xf32>,
    %35 = vector.shape_cast %33 : vector<2x8xf32> to vector<2x8x1xf32>
    %36 = arith.extf %2 : vector<2x8x32xbf16> to vector<2x8x32xf32>
    %37 = vector.broadcast %35 : vector<2x8x1xf32> to vector<2x8x32xf32>
    %38 = arith.mulf %37, %36 : vector<2x8x32xf32>
    %cst_22 = arith.constant dense<0.000000e+00> : vector<2x32xf32>
    %39 = vector.multi_reduction <add>, %38, %cst_22 [1] : vector<2x8x32xf32> to vector<2x32xf32>
    %40 = arith.truncf %39 : vector<2x32xf32> to vector<2x32xbf16>
    %c0_23 = arith.constant 0 : index
    %c0_24 = arith.constant 0 : index
    %41 = vector.load %arg9[%c0_23, %c0_24] : memref<32x512xbf16, #tpu.memory_space<vmem>>, vector<32x512xbf16>
    %cst_25 = arith.constant dense<0.000000e+00> : vector<2x512xf32>
    %42 = tpu.matmul %40, %41, %cst_25 {dimension_numbers = #tpu.dot_dimension_numbers<[1], [0], [0], [1], [0, 0, 1, 1], [], []>} : vector<2x32xbf16>, vector<32x512xbf16>, vector<2x512xf32> -> vector<2x512xf32>
    %c0_26 = arith.constant 0 : index
    %c0_27 = arith.constant 0 : index
    %43 = vector.load %arg10[%c0_26, %c0_27] : memref<32x512xbf16, #tpu.memory_space<vmem>>, vector<32x512xbf16>
    %cst_28 = arith.constant dense<0.000000e+00> : vector<2x512xf32>
    %44 = tpu.matmul %3, %43, %cst_28 {dimension_numbers = #tpu.dot_dimension_numbers<[1], [0], [0], [1], [0, 0, 1, 1], [], []>} : vector<2x32xbf16>, vector<32x512xbf16>, vector<2x512xf32> -> vector<2x512xf32>
    %45 = arith.addf %42, %44 : vector<2x512xf32>
    %46 = arith.addf %45, %14 : vector<2x512xf32>
    %c0_29 = arith.constant 0 : index
    %c0_30 = arith.constant 0 : index
    %47 = vector.load %arg11[%c0_29, %c0_30] : memref<1x512xf32, #tpu.memory_space<vmem>>, vector<1x512xf32>
    %48 = vector.broadcast %47 : vector<1x512xf32> to vector<2x512xf32>
    %49 = arith.addf %46, %48 : vector<2x512xf32>
    %50 = vector.extract_strided_slice %49 {offsets = [0, 0], sizes = [2, 128], strides = [1, 1]} : vector<2x512xf32> to vector<2x128xf32>
    %51 = arith.negf %50 : vector<2x128xf32>
    %52 = math.exp %51 : vector<2x128xf32>
    %cst_31 = arith.constant 1.000000e+00 : f32
    %53 = vector.broadcast %cst_31 : f32 to vector<2x128xf32>
    %54 = arith.addf %53, %52 : vector<2x128xf32>
    %55 = arith.divf %53, %54 : vector<2x128xf32>
    %56 = vector.extract_strided_slice %49 {offsets = [0, 128], sizes = [2, 128], strides = [1, 1]} : vector<2x512xf32> to vector<2x128xf32>
    %57 = arith.negf %56 : vector<2x128xf32>
    %58 = math.exp %57 : vector<2x128xf32>
    %cst_32 = arith.constant 1.000000e+00 : f32
    %59 = vector.broadcast %cst_32 : f32 to vector<2x128xf32>
    %60 = arith.addf %59, %58 : vector<2x128xf32>
    %61 = arith.divf %59, %60 : vector<2x128xf32>
    %62 = vector.extract_strided_slice %49 {offsets = [0, 256], sizes = [2, 128], strides = [1, 1]} : vector<2x512xf32> to vector<2x128xf32>
    %63 = math.tanh %62 : vector<2x128xf32>
    %64 = vector.extract_strided_slice %49 {offsets = [0, 384], sizes = [2, 128], strides = [1, 1]} : vector<2x512xf32> to vector<2x128xf32>
    %65 = arith.negf %64 : vector<2x128xf32>
    %66 = math.exp %65 : vector<2x128xf32>
    %cst_33 = arith.constant 1.000000e+00 : f32
    %67 = vector.broadcast %cst_33 : f32 to vector<2x128xf32>
    %68 = arith.addf %67, %66 : vector<2x128xf32>
    %69 = arith.divf %67, %68 : vector<2x128xf32>
    %70 = arith.mulf %61, %1 : vector<2x128xf32>
    %71 = arith.mulf %55, %63 : vector<2x128xf32>
    %72 = arith.addf %70, %71 : vector<2x128xf32>
    %73 = math.tanh %72 : vector<2x128xf32>
    %74 = arith.mulf %69, %73 : vector<2x128xf32>
    %c0_34 = arith.constant 0 : index
    %c0_35 = arith.constant 0 : index
    %75 = vector.load %arg12[%c0_34, %c0_35] : memref<2x128xf32, #tpu.memory_space<vmem>>, vector<2x128xf32>
    tpu.vector_store %arg12[%c0_34, %c0_35], %74 {strides = array<i32>} : memref<2x128xf32, #tpu.memory_space<vmem>>, vector<2x128xf32>,
    %c0_36 = arith.constant 0 : index
    %c0_37 = arith.constant 0 : index
    %76 = vector.load %arg13[%c0_36, %c0_37] : memref<2x128xf32, #tpu.memory_space<vmem>>, vector<2x128xf32>
    tpu.vector_store %arg13[%c0_36, %c0_37], %72 {strides = array<i32>} : memref<2x128xf32, #tpu.memory_space<vmem>>, vector<2x128xf32>,
    return
  }
  func.func @transform_0(%arg0: i32) -> (i32, i32) {
    %c0_i32 = arith.constant 0 : i32
    %c0_i32_0 = arith.constant 0 : i32
    return %arg0, %c0_i32 : i32, i32
  }
  func.func @transform_1(%arg0: i32) -> (i32, i32) {
    %c0_i32 = arith.constant 0 : i32
    %c0_i32_0 = arith.constant 0 : i32
    return %arg0, %c0_i32 : i32, i32
  }
  func.func @transform_2(%arg0: i32) -> (i32, i32, i32) {
    %c0_i32 = arith.constant 0 : i32
    %c0_i32_0 = arith.constant 0 : i32
    %c0_i32_1 = arith.constant 0 : i32
    return %arg0, %c0_i32, %c0_i32_0 : i32, i32, i32
  }
  func.func @transform_3(%arg0: i32) -> (i32, i32) {
    %c0_i32 = arith.constant 0 : i32
    %c0_i32_0 = arith.constant 0 : i32
    return %arg0, %c0_i32 : i32, i32
  }
  func.func @transform_4(%arg0: i32) -> (i32, i32) {
    %c0_i32 = arith.constant 0 : i32
    %c0_i32_0 = arith.constant 0 : i32
    %c0_i32_1 = arith.constant 0 : i32
    return %c0_i32, %c0_i32_0 : i32, i32
  }
  func.func @transform_5(%arg0: i32) -> (i32, i32) {
    %c0_i32 = arith.constant 0 : i32
    %c0_i32_0 = arith.constant 0 : i32
    %c0_i32_1 = arith.constant 0 : i32
    return %c0_i32, %c0_i32_0 : i32, i32
  }
  func.func @transform_6(%arg0: i32) -> (i32, i32) {
    %c0_i32 = arith.constant 0 : i32
    %c0_i32_0 = arith.constant 0 : i32
    %c0_i32_1 = arith.constant 0 : i32
    return %c0_i32, %c0_i32_0 : i32, i32
  }
  func.func @transform_7(%arg0: i32) -> (i32, i32) {
    %c0_i32 = arith.constant 0 : i32
    %c0_i32_0 = arith.constant 0 : i32
    %c0_i32_1 = arith.constant 0 : i32
    return %c0_i32, %c0_i32_0 : i32, i32
  }
  func.func @transform_8(%arg0: i32) -> (i32, i32) {
    %c0_i32 = arith.constant 0 : i32
    %c0_i32_0 = arith.constant 0 : i32
    %c0_i32_1 = arith.constant 0 : i32
    return %c0_i32, %c0_i32_0 : i32, i32
  }
  func.func @transform_9(%arg0: i32) -> (i32, i32) {
    %c0_i32 = arith.constant 0 : i32
    %c0_i32_0 = arith.constant 0 : i32
    %c0_i32_1 = arith.constant 0 : i32
    return %c0_i32, %c0_i32_0 : i32, i32
  }
  func.func @transform_10(%arg0: i32) -> (i32, i32) {
    %c0_i32 = arith.constant 0 : i32
    %c0_i32_0 = arith.constant 0 : i32
    %c0_i32_1 = arith.constant 0 : i32
    return %c0_i32, %c0_i32_0 : i32, i32
  }
  func.func @transform_11(%arg0: i32) -> (i32, i32) {
    %c0_i32 = arith.constant 0 : i32
    %c0_i32_0 = arith.constant 0 : i32
    return %arg0, %c0_i32 : i32, i32
  }
  func.func @transform_12(%arg0: i32) -> (i32, i32) {
    %c0_i32 = arith.constant 0 : i32
    %c0_i32_0 = arith.constant 0 : i32
    return %arg0, %c0_i32 : i32, i32
  }
  func.func @transform_13(%arg0: i32) -> (i32, i32) {
    %c0_i32 = arith.constant 0 : i32
    %c0_i32_0 = arith.constant 0 : i32
    return %arg0, %c0_i32 : i32, i32
  }
}

module attributes {stable_mosaic.version = 11 : i64} {
  func.func @attention_cell_kernel(%arg0: i32, %arg1: memref<2x128xbf16, #tpu.memory_space<vmem>>, %arg2: memref<2x128xf32, #tpu.memory_space<vmem>>, %arg3: memref<2x8x32xbf16, #tpu.memory_space<vmem>>, %arg4: memref<2x32xbf16, #tpu.memory_space<vmem>>, %arg5: memref<32x128xbf16, #tpu.memory_space<vmem>>, %arg6: memref<128x640xbf16, #tpu.memory_space<vmem>>, %arg7: memref<1x128xf32, #tpu.memory_space<vmem>>, %arg8: memref<1x128xf32, #tpu.memory_space<vmem>>, %arg9: memref<32x512xbf16, #tpu.memory_space<vmem>>, %arg10: memref<32x512xbf16, #tpu.memory_space<vmem>>, %arg11: memref<1x512xf32, #tpu.memory_space<vmem>>, %arg12: memref<2x128xf32, #tpu.memory_space<vmem>>, %arg13: memref<2x128xf32, #tpu.memory_space<vmem>>, %arg14: memref<2x8xf32, #tpu.memory_space<vmem>>) attributes {dimension_semantics = [#tpu.dimension_semantics<parallel>], iteration_bounds = array<i64: 1>, scalar_prefetch = 0 : i64, scratch_operands = 0 : i64, tpu.core_type = #tpu.core_type<tc>, window_params = [{transform_indices = @transform_0, window_bounds = array<i64: 2, 128>}, {transform_indices = @transform_1, window_bounds = array<i64: 2, 128>}, {transform_indices = @transform_2, window_bounds = array<i64: 2, 8, 32>}, {transform_indices = @transform_3, window_bounds = array<i64: 2, 32>}, {pipeline_mode = #tpu.pipeline_mode<synchronous>, transform_indices = @transform_4, window_bounds = array<i64: 32, 128>}, {pipeline_mode = #tpu.pipeline_mode<synchronous>, transform_indices = @transform_5, window_bounds = array<i64: 128, 640>}, {pipeline_mode = #tpu.pipeline_mode<synchronous>, transform_indices = @transform_6, window_bounds = array<i64: 1, 128>}, {pipeline_mode = #tpu.pipeline_mode<synchronous>, transform_indices = @transform_7, window_bounds = array<i64: 1, 128>}, {pipeline_mode = #tpu.pipeline_mode<synchronous>, transform_indices = @transform_8, window_bounds = array<i64: 32, 512>}, {pipeline_mode = #tpu.pipeline_mode<synchronous>, transform_indices = @transform_9, window_bounds = array<i64: 32, 512>}, {pipeline_mode = #tpu.pipeline_mode<synchronous>, transform_indices = @transform_10, window_bounds = array<i64: 1, 512>}, {transform_indices = @transform_11, window_bounds = array<i64: 2, 128>}, {transform_indices = @transform_12, window_bounds = array<i64: 2, 128>}, {transform_indices = @transform_13, window_bounds = array<i64: 2, 8>}]} {
    %c0 = arith.constant 0 : index
    %c0_0 = arith.constant 0 : index
    %0 = vector.load %arg1[%c0, %c0_0] : memref<2x128xbf16, #tpu.memory_space<vmem>>, vector<2x128xbf16>
    %c0_1 = arith.constant 0 : index
    %c0_2 = arith.constant 0 : index
    %1 = vector.load %arg2[%c0_1, %c0_2] : memref<2x128xf32, #tpu.memory_space<vmem>>, vector<2x128xf32>
    %c0_3 = arith.constant 0 : index
    %c0_4 = arith.constant 0 : index
    %c0_5 = arith.constant 0 : index
    %2 = vector.load %arg3[%c0_3, %c0_4, %c0_5] : memref<2x8x32xbf16, #tpu.memory_space<vmem>>, vector<2x8x32xbf16>
    %c0_6 = arith.constant 0 : index
    %c0_7 = arith.constant 0 : index
    %3 = vector.load %arg4[%c0_6, %c0_7] : memref<2x32xbf16, #tpu.memory_space<vmem>>, vector<2x32xbf16>
    %4 = vector.shape_cast %2 : vector<2x8x32xbf16> to vector<16x32xbf16>
    %c0_8 = arith.constant 0 : index
    %c0_9 = arith.constant 0 : index
    %5 = vector.load %arg5[%c0_8, %c0_9] : memref<32x128xbf16, #tpu.memory_space<vmem>>, vector<32x128xbf16>
    %cst = arith.constant dense<0.000000e+00> : vector<16x128xf32>
    %6 = tpu.matmul %4, %5, %cst {dimension_numbers = #tpu.dot_dimension_numbers<[1], [0], [0], [1], [0, 0, 1, 1], [], []>} : vector<16x32xbf16>, vector<32x128xbf16>, vector<16x128xf32> -> vector<16x128xf32>
    %7 = vector.shape_cast %6 : vector<16x128xf32> to vector<2x8x128xf32>
    %c0_10 = arith.constant 0 : index
    %c0_11 = arith.constant 0 : index
    %8 = vector.load %arg6[%c0_10, %c0_11] : memref<128x640xbf16, #tpu.memory_space<vmem>>, vector<128x640xbf16>
    %cst_12 = arith.constant dense<0.000000e+00> : vector<2x640xf32>
    %9 = tpu.matmul %0, %8, %cst_12 {dimension_numbers = #tpu.dot_dimension_numbers<[1], [0], [0], [1], [0, 0, 1, 1], [], []>} : vector<2x128xbf16>, vector<128x640xbf16>, vector<2x640xf32> -> vector<2x640xf32>
    %10 = vector.extract_strided_slice %9 {offsets = [0, 0], sizes = [2, 128], strides = [1, 1]} : vector<2x640xf32> to vector<2x128xf32>
    %c0_13 = arith.constant 0 : index
    %c0_14 = arith.constant 0 : index
    %11 = vector.load %arg7[%c0_13, %c0_14] : memref<1x128xf32, #tpu.memory_space<vmem>>, vector<1x128xf32>
    %12 = vector.broadcast %11 : vector<1x128xf32> to vector<2x128xf32>
    %13 = arith.addf %10, %12 : vector<2x128xf32>
    %14 = vector.extract_strided_slice %9 {offsets = [0, 128], sizes = [2, 512], strides = [1, 1]} : vector<2x640xf32> to vector<2x512xf32>
    %15 = vector.shape_cast %13 : vector<2x128xf32> to vector<2x1x128xf32>
    %16 = vector.broadcast %15 : vector<2x1x128xf32> to vector<2x8x128xf32>
    %17 = arith.addf %7, %16 : vector<2x8x128xf32>
    %18 = math.tanh %17 : vector<2x8x128xf32>
    %c0_15 = arith.constant 0 : index
    %c0_16 = arith.constant 0 : index
    %19 = vector.load %arg8[%c0_15, %c0_16] : memref<1x128xf32, #tpu.memory_space<vmem>>, vector<1x128xf32>
    %20 = vector.shape_cast %19 : vector<1x128xf32> to vector<1x1x128xf32>
    %21 = vector.broadcast %20 : vector<1x1x128xf32> to vector<2x8x128xf32>
    %22 = arith.mulf %18, %21 : vector<2x8x128xf32>
    %cst_17 = arith.constant dense<0.000000e+00> : vector<2x8xf32>
    %23 = vector.multi_reduction <add>, %22, %cst_17 [2] : vector<2x8x128xf32> to vector<2x8xf32>
    %cst_18 = arith.constant dense<0xFF800000> : vector<2xf32>
    %24 = vector.multi_reduction <maximumf>, %23, %cst_18 [1] : vector<2x8xf32> to vector<2xf32>
    %25 = vector.shape_cast %24 : vector<2xf32> to vector<2x1xf32>
    %26 = vector.broadcast %25 : vector<2x1xf32> to vector<2x8xf32>
    %27 = arith.subf %23, %26 : vector<2x8xf32>
    %28 = math.exp %27 : vector<2x8xf32>
    %cst_19 = arith.constant dense<0.000000e+00> : vector<2xf32>
    %29 = vector.multi_reduction <add>, %28, %cst_19 [1] : vector<2x8xf32> to vector<2xf32>
    %30 = vector.shape_cast %29 : vector<2xf32> to vector<2x1xf32>
    %31 = tpu.reciprocal %30 {approx = true} : vector<2x1xf32> -> vector<2x1xf32>
    %32 = vector.broadcast %31 : vector<2x1xf32> to vector<2x8xf32>
    %33 = arith.mulf %28, %32 : vector<2x8xf32>
    %c0_20 = arith.constant 0 : index
    %c0_21 = arith.constant 0 : index
    %34 = vector.load %arg14[%c0_20, %c0_21] : memref<2x8xf32, #tpu.memory_space<vmem>>, vector<2x8xf32>
    tpu.vector_store %arg14[%c0_20, %c0_21], %33 {strides = array<i32>} : memref<2x8xf32, #tpu.memory_space<vmem>>, vector<2x8xf32>,
    %35 = vector.shape_cast %33 : vector<2x8xf32> to vector<2x8x1xf32>
    %36 = arith.extf %2 : vector<2x8x32xbf16> to vector<2x8x32xf32>
    %37 = vector.broadcast %35 : vector<2x8x1xf32> to vector<2x8x32xf32>
    %38 = arith.mulf %37, %36 : vector<2x8x32xf32>
    %cst_22 = arith.constant dense<0.000000e+00> : vector<2x32xf32>
    %39 = vector.multi_reduction <add>, %38, %cst_22 [1] : vector<2x8x32xf32> to vector<2x32xf32>
    %40 = arith.truncf %39 : vector<2x32xf32> to vector<2x32xbf16>
    %c0_23 = arith.constant 0 : index
    %c0_24 = arith.constant 0 : index
    %41 = vector.load %arg9[%c0_23, %c0_24] : memref<32x512xbf16, #tpu.memory_space<vmem>>, vector<32x512xbf16>
    %cst_25 = arith.constant dense<0.000000e+00> : vector<2x512xf32>
    %42 = tpu.matmul %40, %41, %cst_25 {dimension_numbers = #tpu.dot_dimension_numbers<[1], [0], [0], [1], [0, 0, 1, 1], [], []>} : vector<2x32xbf16>, vector<32x512xbf16>, vector<2x512xf32> -> vector<2x512xf32>
    %c0_26 = arith.constant 0 : index
    %c0_27 = arith.constant 0 : index
    %43 = vector.load %arg10[%c0_26, %c0_27] : memref<32x512xbf16, #tpu.memory_space<vmem>>, vector<32x512xbf16>
    %cst_28 = arith.constant dense<0.000000e+00> : vector<2x512xf32>
    %44 = tpu.matmul %3, %43, %cst_28 {dimension_numbers = #tpu.dot_dimension_numbers<[1], [0], [0], [1], [0, 0, 1, 1], [], []>} : vector<2x32xbf16>, vector<32x512xbf16>, vector<2x512xf32> -> vector<2x512xf32>
    %45 = arith.addf %42, %44 : vector<2x512xf32>
    %46 = arith.addf %45, %14 : vector<2x512xf32>
    %c0_29 = arith.constant 0 : index
    %c0_30 = arith.constant 0 : index
    %47 = vector.load %arg11[%c0_29, %c0_30] : memref<1x512xf32, #tpu.memory_space<vmem>>, vector<1x512xf32>
    %48 = vector.broadcast %47 : vector<1x512xf32> to vector<2x512xf32>
    %49 = arith.addf %46, %48 : vector<2x512xf32>
    %50 = vector.extract_strided_slice %49 {offsets = [0, 0], sizes = [2, 128], strides = [1, 1]} : vector<2x512xf32> to vector<2x128xf32>
    %51 = arith.negf %50 : vector<2x128xf32>
    %52 = math.exp %51 : vector<2x128xf32>
    %cst_31 = arith.constant 1.000000e+00 : f32
    %53 = vector.broadcast %cst_31 : f32 to vector<2x128xf32>
    %54 = arith.addf %53, %52 : vector<2x128xf32>
    %55 = arith.divf %53, %54 : vector<2x128xf32>
    %56 = vector.extract_strided_slice %49 {offsets = [0, 128], sizes = [2, 128], strides = [1, 1]} : vector<2x512xf32> to vector<2x128xf32>
    %57 = arith.negf %56 : vector<2x128xf32>
    %58 = math.exp %57 : vector<2x128xf32>
    %cst_32 = arith.constant 1.000000e+00 : f32
    %59 = vector.broadcast %cst_32 : f32 to vector<2x128xf32>
    %60 = arith.addf %59, %58 : vector<2x128xf32>
    %61 = arith.divf %59, %60 : vector<2x128xf32>
    %62 = vector.extract_strided_slice %49 {offsets = [0, 256], sizes = [2, 128], strides = [1, 1]} : vector<2x512xf32> to vector<2x128xf32>
    %63 = math.tanh %62 : vector<2x128xf32>
    %64 = vector.extract_strided_slice %49 {offsets = [0, 384], sizes = [2, 128], strides = [1, 1]} : vector<2x512xf32> to vector<2x128xf32>
    %65 = arith.negf %64 : vector<2x128xf32>
    %66 = math.exp %65 : vector<2x128xf32>
    %cst_33 = arith.constant 1.000000e+00 : f32
    %67 = vector.broadcast %cst_33 : f32 to vector<2x128xf32>
    %68 = arith.addf %67, %66 : vector<2x128xf32>
    %69 = arith.divf %67, %68 : vector<2x128xf32>
    %70 = arith.mulf %61, %1 : vector<2x128xf32>
    %71 = arith.mulf %55, %63 : vector<2x128xf32>
    %72 = arith.addf %70, %71 : vector<2x128xf32>
    %73 = math.tanh %72 : vector<2x128xf32>
    %74 = arith.mulf %69, %73 : vector<2x128xf32>
    %c0_34 = arith.constant 0 : index
    %c0_35 = arith.constant 0 : index
    %75 = vector.load %arg12[%c0_34, %c0_35] : memref<2x128xf32, #tpu.memory_space<vmem>>, vector<2x128xf32>
    tpu.vector_store %arg12[%c0_34, %c0_35], %74 {strides = array<i32>} : memref<2x128xf32, #tpu.memory_space<vmem>>, vector<2x128xf32>,
    %c0_36 = arith.constant 0 : index
    %c0_37 = arith.constant 0 : index
    %76 = vector.load %arg13[%c0_36, %c0_37] : memref<2x128xf32, #tpu.memory_space<vmem>>, vector<2x128xf32>
    tpu.vector_store %arg13[%c0_36, %c0_37], %72 {strides = array<i32>} : memref<2x128xf32, #tpu.memory_space<vmem>>, vector<2x128xf32>,
    return
  }
  func.func @transform_0(%arg0: i32) -> (i32, i32) {
    %c0_i32 = arith.constant 0 : i32
    %c0_i32_0 = arith.constant 0 : i32
    return %arg0, %c0_i32 : i32, i32
  }
  func.func @transform_1(%arg0: i32) -> (i32, i32) {
    %c0_i32 = arith.constant 0 : i32
    %c0_i32_0 = arith.constant 0 : i32
    return %arg0, %c0_i32 : i32, i32
  }
  func.func @transform_2(%arg0: i32) -> (i32, i32, i32) {
    %c0_i32 = arith.constant 0 : i32
    %c0_i32_0 = arith.constant 0 : i32
    %c0_i32_1 = arith.constant 0 : i32
    return %arg0, %c0_i32, %c0_i32_0 : i32, i32, i32
  }
  func.func @transform_3(%arg0: i32) -> (i32, i32) {
    %c0_i32 = arith.constant 0 : i32
    %c0_i32_0 = arith.constant 0 : i32
    return %arg0, %c0_i32 : i32, i32
  }
  func.func @transform_4(%arg0: i32) -> (i32, i32) {
    %c0_i32 = arith.constant 0 : i32
    %c0_i32_0 = arith.constant 0 : i32
    %c0_i32_1 = arith.constant 0 : i32
    return %c0_i32, %c0_i32_0 : i32, i32
  }
  func.func @transform_5(%arg0: i32) -> (i32, i32) {
    %c0_i32 = arith.constant 0 : i32
    %c0_i32_0 = arith.constant 0 : i32
    %c0_i32_1 = arith.constant 0 : i32
    return %c0_i32, %c0_i32_0 : i32, i32
  }
  func.func @transform_6(%arg0: i32) -> (i32, i32) {
    %c0_i32 = arith.constant 0 : i32
    %c0_i32_0 = arith.constant 0 : i32
    %c0_i32_1 = arith.constant 0 : i32
    return %c0_i32, %c0_i32_0 : i32, i32
  }
  func.func @transform_7(%arg0: i32) -> (i32, i32) {
    %c0_i32 = arith.constant 0 : i32
    %c0_i32_0 = arith.constant 0 : i32
    %c0_i32_1 = arith.constant 0 : i32
    return %c0_i32, %c0_i32_0 : i32, i32
  }
  func.func @transform_8(%arg0: i32) -> (i32, i32) {
    %c0_i32 = arith.constant 0 : i32
    %c0_i32_0 = arith.constant 0 : i32
    %c0_i32_1 = arith.constant 0 : i32
    return %c0_i32, %c0_i32_0 : i32, i32
  }
  func.func @transform_9(%arg0: i32) -> (i32, i32) {
    %c0_i32 = arith.constant 0 : i32
    %c0_i32_0 = arith.constant 0 : i32
    %c0_i32_1 = arith.constant 0 : i32
    return %c0_i32, %c0_i32_0 : i32, i32
  }
  func.func @transform_10(%arg0: i32) -> (i32, i32) {
    %c0_i32 = arith.constant 0 : i32
    %c0_i32_0 = arith.constant 0 : i32
    %c0_i32_1 = arith.constant 0 : i32
    return %c0_i32, %c0_i32_0 : i32, i32
  }
  func.func @transform_11(%arg0: i32) -> (i32, i32) {
    %c0_i32 = arith.constant 0 : i32
    %c0_i32_0 = arith.constant 0 : i32
    return %arg0, %c0_i32 : i32, i32
  }
  func.func @transform_12(%arg0: i32) -> (i32, i32) {
    %c0_i32 = arith.constant 0 : i32
    %c0_i32_0 = arith.constant 0 : i32
    return %arg0, %c0_i32 : i32, i32
  }
  func.func @transform_13(%arg0: i32) -> (i32, i32) {
    %c0_i32 = arith.constant 0 : i32
    %c0_i32_0 = arith.constant 0 : i32
    return %arg0, %c0_i32 : i32, i32
  }
}

</mosaic_0001>

<llo_original>
// kernel: tpu_custom_call.1
$region0: #{tpu_custom_call.1}
  #allocation0 [shape = 'u32[]', space=smem, size = 0x4, offset = 0x4, fixed_abs, tag = 'smem constant byte address 0x4 - core index']
  #allocation1 [shape = 'u32[144,128]{1,0:T(1,128)}', space=vmem, size = 0x12000, scoped, tag = 'internal scratch']
  %s0 = inlined_call_operand.hbm [shape: bf16[2,128], index: 0, kind: input, shape index: {}]
  %s1 = inlined_call_operand.vmem [shape: f32[2,128], index: 1, kind: input, shape index: {}]
  %s2 = inlined_call_operand.hbm [shape: bf16[2,8,32], index: 2, kind: input, shape index: {}]
  %s3 = inlined_call_operand.vmem [shape: bf16[2,32], index: 3, kind: input, shape index: {}]
  %s4 = inlined_call_operand.hbm [shape: bf16[32,128], index: 4, kind: input, shape index: {}]
  %s5 = inlined_call_operand.hbm [shape: bf16[128,640], index: 5, kind: input, shape index: {}]
  %s6 = inlined_call_operand.vmem [shape: f32[1,128], index: 6, kind: input, shape index: {}]
  %s7 = inlined_call_operand.vmem [shape: f32[1,128], index: 7, kind: input, shape index: {}]
  %s8 = inlined_call_operand.hbm [shape: bf16[32,512], index: 8, kind: input, shape index: {}]
  %s9 = inlined_call_operand.hbm [shape: bf16[32,512], index: 9, kind: input, shape index: {}]
  %s10 = inlined_call_operand.vmem [shape: f32[1,512], index: 10, kind: input, shape index: {}]
  %s11 = inlined_call_operand.hbm [shape: f32[2,128], index: 11, kind: output, shape index: {0}]
  %s12 = inlined_call_operand.hbm [shape: f32[2,128], index: 12, kind: output, shape index: {1}]
  %s13 = inlined_call_operand.hbm [shape: f32[2,8], index: 13, kind: output, shape index: {2}]
  %14 = xla_tuple %s11, %s12, %s13
  %s15 = sld [smem:[#allocation0]]
  $region94: #{tpu_custom_call.1} parent=0
    _
  %s17 = ssub.s32 1, %s15
  %s18 = scalar_select 0, %s17, %s15
  $region1: #{tpu_custom_call.1} parent=0
    #allocation2 [shape = 'u8[512]{0}', space=vmem, size = 0x400, scoped, tag = 'input window, operand 0, single buffered']
    #allocation3 [shape = 's32[1]{0}', space=sflag, size = 0x4, scoped, tag = 'scoped memory for tpu_custom_call.1']
    #allocation4 [shape = 's32[1]{0}', space=sflag, size = 0x4, scoped, tag = 'scoped memory for tpu_custom_call.1']
    #allocation5 [shape = 'u8[4096]{0}', space=vmem, size = 0x1000, scoped, tag = 'input window, operand 2, single buffered']
    #allocation6 [shape = 's32[1]{0}', space=sflag, size = 0x4, scoped, tag = 'scoped memory for tpu_custom_call.1']
    #allocation7 [shape = 'u8[8192]{0}', space=vmem, size = 0x2000, scoped, tag = 'input window, operand 4, single buffered']
    #allocation8 [shape = 'u8[163840]{0}', space=vmem, size = 0x28000, scoped, tag = 'input window, operand 5, single buffered']
    #allocation9 [shape = 's32[1]{0}', space=sflag, size = 0x4, scoped, tag = 'scoped memory for tpu_custom_call.1']
    #allocation10 [shape = 'u8[32768]{0}', space=vmem, size = 0x8000, scoped, tag = 'input window, operand 8, single buffered']
    #allocation11 [shape = 'u8[32768]{0}', space=vmem, size = 0x8000, scoped, tag = 'input window, operand 9, single buffered']
    #allocation12 [shape = 's32[1]{0}', space=sflag, size = 0x4, scoped, tag = 'scoped memory for tpu_custom_call.1']
    #allocation13 [shape = 'u8[1024]{0}', space=vmem, size = 0x400, scoped, tag = 'output window, operand 0, single buffered']
    #allocation14 [shape = 'u8[1024]{0}', space=vmem, size = 0x400, scoped, tag = 'output window, operand 1, single buffered']
    #allocation15 [shape = 's32[1]{0}', space=sflag, size = 0x4, scoped, tag = 'scoped memory for tpu_custom_call.1']
    #allocation16 [shape = 'u8[1024]{0}', space=vmem, size = 0x400, scoped, tag = 'output window, operand 2, single buffered']
    %19 = vsyncpa [#allocation3], 0
    %20 = vsyncpa [#allocation6], 0
    %21 = vsyncpa [#allocation9], 0
    %22 = vsyncpa [#allocation12], 0
    %23 = vsyncpa [#allocation4], 0
    %24 = vsyncpa [#allocation15], 0
    // Predicated region
    $region2: #{tpu_custom_call.1} parent=1 // pred_check
      _
    $region3: #{tpu_custom_call.1} parent=1 // pred_check_branch
      %26 = sbr.rel (0) target = $region5
    $region4: #{tpu_custom_call.1} parent=1 // pred_region
      %s28 = ssub.s32 16, 16
      %29 = vsyncadd [#allocation3], %s28
      %s31 = sshll.u32 [#allocation2], 4
      %s32 = int_to_ptr.vmem [resolvable:$true] %s31
      %34 = dma.hbm_to_vmem [thread:$0]  %s0, 16, %s32, [#allocation3]
    $region5: #{tpu_custom_call.1} parent=1 // pred_fallthru
      _
    // Predicated region
    $region6: #{tpu_custom_call.1} parent=1 // pred_check
      _
    $region7: #{tpu_custom_call.1} parent=1 // pred_check_branch
      %36 = sbr.rel (0) target = $region9
    $region8: #{tpu_custom_call.1} parent=1 // pred_region
      _
    $region9: #{tpu_custom_call.1} parent=1 // pred_fallthru
      _
    // Predicated region
    $region10: #{tpu_custom_call.1} parent=1 // pred_check
      _
    $region11: #{tpu_custom_call.1} parent=1 // pred_check_branch
      %38 = sbr.rel (0) target = $region13
    $region12: #{tpu_custom_call.1} parent=1 // pred_region
      %s40 = ssub.s32 128, 128
      %41 = vsyncadd [#allocation6], %s40
      %s42 = sshll.u32 [#allocation5], 4
      %s43 = int_to_ptr.vmem [resolvable:$true] %s42
      %48 = dma.hbm_to_vmem [thread:$0]  %s2, 128, %s43, [#allocation6], 64, 64, 4
    $region13: #{tpu_custom_call.1} parent=1 // pred_fallthru
      _
    // Predicated region
    $region14: #{tpu_custom_call.1} parent=1 // pred_check
      _
    $region15: #{tpu_custom_call.1} parent=1 // pred_check_branch
      %50 = sbr.rel (0) target = $region17
    $region16: #{tpu_custom_call.1} parent=1 // pred_region
      _
    $region17: #{tpu_custom_call.1} parent=1 // pred_fallthru
      _
    // Predicated region
    $region18: #{tpu_custom_call.1} parent=1 // pred_check
      _
    $region19: #{tpu_custom_call.1} parent=1 // pred_check_branch
      %52 = sbr.rel (0) target = $region21
    $region20: #{tpu_custom_call.1} parent=1 // pred_region
      %s54 = ssub.s32 256, 256
      %55 = vsyncadd [#allocation6], %s54
      %s56 = sshll.u32 [#allocation7], 4
      %s57 = int_to_ptr.vmem [resolvable:$true] %s56
      %62 = dma.hbm_to_vmem [thread:$0]  %s4, 256, %s57, [#allocation6], 64, 64, 4
    $region21: #{tpu_custom_call.1} parent=1 // pred_fallthru
      _
    // Predicated region
    $region22: #{tpu_custom_call.1} parent=1 // pred_check
      _
    $region23: #{tpu_custom_call.1} parent=1 // pred_check_branch
      %64 = sbr.rel (0) target = $region25
    $region24: #{tpu_custom_call.1} parent=1 // pred_region
      %s66 = ssub.s32 5120, 5120
      %67 = vsyncadd [#allocation9], %s66
      %s68 = sshll.u32 [#allocation8], 4
      %s69 = int_to_ptr.vmem [resolvable:$true] %s68
      %74 = dma.hbm_to_vmem [thread:$0]  %s5, 5120, %s69, [#allocation9], 320, 320, 20
    $region25: #{tpu_custom_call.1} parent=1 // pred_fallthru
      _
    // Predicated region
    $region26: #{tpu_custom_call.1} parent=1 // pred_check
      _
    $region27: #{tpu_custom_call.1} parent=1 // pred_check_branch
      %76 = sbr.rel (0) target = $region29
    $region28: #{tpu_custom_call.1} parent=1 // pred_region
      _
    $region29: #{tpu_custom_call.1} parent=1 // pred_fallthru
      _
    // Predicated region
    $region30: #{tpu_custom_call.1} parent=1 // pred_check
      _
    $region31: #{tpu_custom_call.1} parent=1 // pred_check_branch
      %78 = sbr.rel (0) target = $region33
    $region32: #{tpu_custom_call.1} parent=1 // pred_region
      _
    $region33: #{tpu_custom_call.1} parent=1 // pred_fallthru
      _
    // Predicated region
    $region34: #{tpu_custom_call.1} parent=1 // pred_check
      _
    $region35: #{tpu_custom_call.1} parent=1 // pred_check_branch
      %80 = sbr.rel (0) target = $region37
    $region36: #{tpu_custom_call.1} parent=1 // pred_region
      %s82 = ssub.s32 1024, 1024
      %83 = vsyncadd [#allocation9], %s82
      %s84 = sshll.u32 [#allocation10], 4
      %s85 = int_to_ptr.vmem [resolvable:$true] %s84
      %90 = dma.hbm_to_vmem [thread:$0]  %s8, 1024, %s85, [#allocation9], 256, 256, 16
    $region37: #{tpu_custom_call.1} parent=1 // pred_fallthru
      _
    // Predicated region
    $region38: #{tpu_custom_call.1} parent=1 // pred_check
      _
    $region39: #{tpu_custom_call.1} parent=1 // pred_check_branch
      %92 = sbr.rel (0) target = $region41
    $region40: #{tpu_custom_call.1} parent=1 // pred_region
      %s94 = ssub.s32 1024, 1024
      %95 = vsyncadd [#allocation12], %s94
      %s96 = sshll.u32 [#allocation11], 4
      %s97 = int_to_ptr.vmem [resolvable:$true] %s96
      %102 = dma.hbm_to_vmem [thread:$0]  %s9, 1024, %s97, [#allocation12], 256, 256, 16
    $region41: #{tpu_custom_call.1} parent=1 // pred_fallthru
      _
    // Predicated region
    $region42: #{tpu_custom_call.1} parent=1 // pred_check
      _
    $region43: #{tpu_custom_call.1} parent=1 // pred_check_branch
      %104 = sbr.rel (0) target = $region45
    $region44: #{tpu_custom_call.1} parent=1 // pred_region
      _
    $region45: #{tpu_custom_call.1} parent=1 // pred_fallthru
      _
    // Predicated region
    $region46: #{tpu_custom_call.1} parent=1 // pred_check
      _
    $region47: #{tpu_custom_call.1} parent=1 // pred_check_branch
      %106 = sbr.rel (0) target = $region49
    $region48: #{tpu_custom_call.1} parent=1 // pred_region
      %107 = dma.done [#allocation3], 16
    $region49: #{tpu_custom_call.1} parent=1 // pred_fallthru
      _
    // Predicated region
    $region50: #{tpu_custom_call.1} parent=1 // pred_check
      _
    $region51: #{tpu_custom_call.1} parent=1 // pred_check_branch
      %109 = sbr.rel (0) target = $region53
    $region52: #{tpu_custom_call.1} parent=1 // pred_region
      %110 = dma.done [#allocation6], 128
    $region53: #{tpu_custom_call.1} parent=1 // pred_fallthru
      _
    // Predicated region
    $region54: #{tpu_custom_call.1} parent=1 // pred_check
      _
    $region55: #{tpu_custom_call.1} parent=1 // pred_check_branch
      %112 = sbr.rel (0) target = $region57
    $region56: #{tpu_custom_call.1} parent=1 // pred_region
      %113 = dma.done [#allocation6], 256
    $region57: #{tpu_custom_call.1} parent=1 // pred_fallthru
      _
    // Predicated region
    $region58: #{tpu_custom_call.1} parent=1 // pred_check
      _
    $region59: #{tpu_custom_call.1} parent=1 // pred_check_branch
      %115 = sbr.rel (0) target = $region61
    $region60: #{tpu_custom_call.1} parent=1 // pred_region
      %116 = dma.done [#allocation9], 5120
    $region61: #{tpu_custom_call.1} parent=1 // pred_fallthru
      _
    // Predicated region
    $region62: #{tpu_custom_call.1} parent=1 // pred_check
      _
    $region63: #{tpu_custom_call.1} parent=1 // pred_check_branch
      %118 = sbr.rel (0) target = $region65
    $region64: #{tpu_custom_call.1} parent=1 // pred_region
      %119 = dma.done [#allocation9], 1024
    $region65: #{tpu_custom_call.1} parent=1 // pred_fallthru
      _
    // Predicated region
    $region66: #{tpu_custom_call.1} parent=1 // pred_check
      _
    $region67: #{tpu_custom_call.1} parent=1 // pred_check_branch
      %121 = sbr.rel (0) target = $region69
    $region68: #{tpu_custom_call.1} parent=1 // pred_region
      %122 = dma.done [#allocation12], 1024
    $region69: #{tpu_custom_call.1} parent=1 // pred_fallthru
      _
    %v124 = vld [vmem:[#allocation2] sm:$0x1]
    %v125 = vld [vmem:[%s1] sm:$0x3]
    %v126 = vld [vmem:[#allocation5] sm:$0xf]
    %v127 = vld [vmem:[#allocation5 + $0x4] sm:$0xf]
    %v128 = vld [vmem:[%s3] sm:$0x1]
    %v129 = vld [vmem:[#allocation7] sm:$0xf]
    %v130 = vld [vmem:[#allocation7 + $0x4] sm:$0xf]
    %v131 = vld [vmem:[#allocation7 + $0x8] sm:$0xf]
    %v132 = vld [vmem:[#allocation7 + $0xc] sm:$0xf]
    %v135 = vunpack.c.l.b16 %v126
    %v136 = vunpack.c.l.b16 %v127
    %v137 = vpack.c.b16 %v136, %v135
    %v142 = vunpack.c.l.b16 %v129
    %v143 = vunpack.c.l.b16 %v130
    %v144 = vunpack.c.l.b16 %v131
    %v145 = vunpack.c.l.b16 %v132
    %v146 = vpack.c.b16 %v143, %v142
    %v147 = vpack.c.b16 %v145, %v144
    %vm150 = vcmask 261120
    %v152 = vsel %vm150, %v137, 0
    %154 = vmatprep.subr.bf16.mxu0 0
    %155 = vmatpush1.bf16.msra.mxu0 %v146
    %156 = vmatprep.subr.bf16.mxu0 0
    %157 = vmatpush1.bf16.msra.mxu0 %v147
    %158 = vmatprep.subr.bf16.mxu0 0
    %159 = vmatpush1.bf16.msra.mxu0 0
    %160 = vmatprep.subr.bf16.mxu0 0
    %161 = vmatpush1.bf16.msra.mxu0 0
    %162 = vmatprep.subr.bf16.mxu0 0
    %163 = vmatpush1.bf16.msra.mxu0 0
    %164 = vmatprep.subr.bf16.mxu0 0
    %165 = vmatpush1.bf16.msra.mxu0 0
    %166 = vmatprep.subr.bf16.mxu0 0
    %167 = vmatpush1.bf16.msra.mxu0 0
    %168 = vmatprep.subr.bf16.mxu0 0
    %169 = vmatpush1.bf16.msra.mxu0 0
    %170 = vmatprep.subr.bf16.mxu0 0
    %171 = vmatpush1.bf16.msra.mxu0 0
    %172 = vmatprep.subr.bf16.mxu0 0
    %173 = vmatpush1.bf16.msra.mxu0 0
    %174 = vmatprep.subr.bf16.mxu0 0
    %175 = vmatpush1.bf16.msra.mxu0 0
    %176 = vmatprep.subr.bf16.mxu0 0
    %177 = vmatpush1.bf16.msra.mxu0 0
    %178 = vmatprep.subr.bf16.mxu0 0
    %179 = vmatpush1.bf16.msra.mxu0 0
    %180 = vmatprep.subr.bf16.mxu0 0
    %181 = vmatpush1.bf16.msra.mxu0 0
    %182 = vmatprep.subr.bf16.mxu0 0
    %183 = vmatpush1.bf16.msra.mxu0 0
    %184 = vmatprep.subr.bf16.mxu0 0
    %185 = vmatpush1.bf16.msra.mxu0 0
    %186 = vmatprep.mubr.bf16.mxu0 0
    %187 = vmatmul.mubr.bf16.gmra.mrb[0].mxu0 %v152
    %v188 = vpop.f32.mrb[0].mxu0
    %v189 = vadd.f32 0.0, %v188
    %v190 = vpop.f32.mrb[0].mxu0
    %v191 = vpop.f32.mrb[0].mxu0
    %v192 = vadd.f32 0.0, %v191
    %v193 = vpop.f32.mrb[0].mxu0
    %194 = vdwg.mxu0
    %v195 = vld [vmem:[#allocation8] sm:$0xff]
    %v196 = vld [vmem:[#allocation8 + $0x8] sm:$0xff]
    %v197 = vld [vmem:[#allocation8 + $0x10] sm:$0xf]
    %v198 = vld [vmem:[#allocation8 + $0x14] sm:$0xff]
    %v199 = vld [vmem:[#allocation8 + $0x1c] sm:$0xff]
    %v200 = vld [vmem:[#allocation8 + $0x24] sm:$0xf]
    %v201 = vld [vmem:[#allocation8 + $0x28] sm:$0xff]
    %v202 = vld [vmem:[#allocation8 + $0x30] sm:$0xff]
    %v203 = vld [vmem:[#allocation8 + $0x38] sm:$0xf]
    %v204 = vld [vmem:[#allocation8 + $0x3c] sm:$0xff]
    %v205 = vld [vmem:[#allocation8 + $0x44] sm:$0xff]
    %v206 = vld [vmem:[#allocation8 + $0x4c] sm:$0xf]
    %v207 = vld [vmem:[#allocation8 + $0x50] sm:$0xff]
    %v208 = vld [vmem:[#allocation8 + $0x58] sm:$0xff]
    %v209 = vld [vmem:[#allocation8 + $0x60] sm:$0xf]
    %v210 = vld [vmem:[#allocation8 + $0x64] sm:$0xff]
    %v211 = vld [vmem:[#allocation8 + $0x6c] sm:$0xff]
    %v212 = vld [vmem:[#allocation8 + $0x74] sm:$0xf]
    %v213 = vld [vmem:[#allocation8 + $0x78] sm:$0xff]
    %v214 = vld [vmem:[#allocation8 + $0x80] sm:$0xff]
    %v215 = vld [vmem:[#allocation8 + $0x88] sm:$0xf]
    %v216 = vld [vmem:[#allocation8 + $0x8c] sm:$0xff]
    %v217 = vld [vmem:[#allocation8 + $0x94] sm:$0xff]
    %v218 = vld [vmem:[#allocation8 + $0x9c] sm:$0xf]
    %v219 = vld [vmem:[#allocation8 + $0xa0] sm:$0xff]
    %v220 = vld [vmem:[#allocation8 + $0xa8] sm:$0xff]
    %v221 = vld [vmem:[#allocation8 + $0xb0] sm:$0xf]
    %v222 = vld [vmem:[#allocation8 + $0xb4] sm:$0xff]
    %v223 = vld [vmem:[#allocation8 + $0xbc] sm:$0xff]
    %v224 = vld [vmem:[#allocation8 + $0xc4] sm:$0xf]
    %v225 = vld [vmem:[#allocation8 + $0xc8] sm:$0xff]
    %v226 = vld [vmem:[#allocation8 + $0xd0] sm:$0xff]
    %v227 = vld [vmem:[#allocation8 + $0xd8] sm:$0xf]
    %v228 = vld [vmem:[#allocation8 + $0xdc] sm:$0xff]
    %v229 = vld [vmem:[#allocation8 + $0xe4] sm:$0xff]
    %v230 = vld [vmem:[#allocation8 + $0xec] sm:$0xf]
    %v231 = vld [vmem:[#allocation8 + $0xf0] sm:$0xff]
    %v232 = vld [vmem:[#allocation8 + $0xf8] sm:$0xff]
    %v233 = vld [vmem:[#allocation8 + $0x100] sm:$0xf]
    %v234 = vld [vmem:[#allocation8 + $0x104] sm:$0xff]
    %v235 = vld [vmem:[#allocation8 + $0x10c] sm:$0xff]
    %v236 = vld [vmem:[#allocation8 + $0x114] sm:$0xf]
    %v237 = vld [vmem:[#allocation8 + $0x118] sm:$0xff]
    %v238 = vld [vmem:[#allocation8 + $0x120] sm:$0xff]
    %v239 = vld [vmem:[#allocation8 + $0x128] sm:$0xf]
    %v240 = vld [vmem:[#allocation8 + $0x12c] sm:$0xff]
    %v241 = vld [vmem:[#allocation8 + $0x134] sm:$0xff]
    %v242 = vld [vmem:[#allocation8 + $0x13c] sm:$0xf]
    %v291 = vunpack.c.l.b16 %v195
    %v292 = vunpack.c.h.b16 %v195
    %v293 = vunpack.c.l.b16 %v196
    %v294 = vunpack.c.h.b16 %v196
    %v295 = vunpack.c.l.b16 %v197
    %v296 = vunpack.c.l.b16 %v198
    %v297 = vunpack.c.h.b16 %v198
    %v298 = vunpack.c.l.b16 %v199
    %v299 = vunpack.c.h.b16 %v199
    %v300 = vunpack.c.l.b16 %v200
    %v301 = vunpack.c.l.b16 %v201
    %v302 = vunpack.c.h.b16 %v201
    %v303 = vunpack.c.l.b16 %v202
    %v304 = vunpack.c.h.b16 %v202
    %v305 = vunpack.c.l.b16 %v203
    %v306 = vunpack.c.l.b16 %v204
    %v307 = vunpack.c.h.b16 %v204
    %v308 = vunpack.c.l.b16 %v205
    %v309 = vunpack.c.h.b16 %v205
    %v310 = vunpack.c.l.b16 %v206
    %v311 = vunpack.c.l.b16 %v207
    %v312 = vunpack.c.h.b16 %v207
    %v313 = vunpack.c.l.b16 %v208
    %v314 = vunpack.c.h.b16 %v208
    %v315 = vunpack.c.l.b16 %v209
    %v316 = vunpack.c.l.b16 %v210
    %v317 = vunpack.c.h.b16 %v210
    %v318 = vunpack.c.l.b16 %v211
    %v319 = vunpack.c.h.b16 %v211
    %v320 = vunpack.c.l.b16 %v212
    %v321 = vunpack.c.l.b16 %v213
    %v322 = vunpack.c.h.b16 %v213
    %v323 = vunpack.c.l.b16 %v214
    %v324 = vunpack.c.h.b16 %v214
    %v325 = vunpack.c.l.b16 %v215
    %v326 = vunpack.c.l.b16 %v216
    %v327 = vunpack.c.h.b16 %v216
    %v328 = vunpack.c.l.b16 %v217
    %v329 = vunpack.c.h.b16 %v217
    %v330 = vunpack.c.l.b16 %v218
    %v331 = vunpack.c.l.b16 %v219
    %v332 = vunpack.c.h.b16 %v219
    %v333 = vunpack.c.l.b16 %v220
    %v334 = vunpack.c.h.b16 %v220
    %v335 = vunpack.c.l.b16 %v221
    %v336 = vunpack.c.l.b16 %v222
    %v337 = vunpack.c.h.b16 %v222
    %v338 = vunpack.c.l.b16 %v223
    %v339 = vunpack.c.h.b16 %v223
    %v340 = vunpack.c.l.b16 %v224
    %v341 = vunpack.c.l.b16 %v225
    %v342 = vunpack.c.h.b16 %v225
    %v343 = vunpack.c.l.b16 %v226
    %v344 = vunpack.c.h.b16 %v226
    %v345 = vunpack.c.l.b16 %v227
    %v346 = vunpack.c.l.b16 %v228
    %v347 = vunpack.c.h.b16 %v228
    %v348 = vunpack.c.l.b16 %v229
    %v349 = vunpack.c.h.b16 %v229
    %v350 = vunpack.c.l.b16 %v230
    %v351 = vunpack.c.l.b16 %v231
    %v352 = vunpack.c.h.b16 %v231
    %v353 = vunpack.c.l.b16 %v232
    %v354 = vunpack.c.h.b16 %v232
    %v355 = vunpack.c.l.b16 %v233
    %v356 = vunpack.c.l.b16 %v234
    %v357 = vunpack.c.h.b16 %v234
    %v358 = vunpack.c.l.b16 %v235
    %v359 = vunpack.c.h.b16 %v235
    %v360 = vunpack.c.l.b16 %v236
    %v361 = vunpack.c.l.b16 %v237
    %v362 = vunpack.c.h.b16 %v237
    %v363 = vunpack.c.l.b16 %v238
    %v364 = vunpack.c.h.b16 %v238
    %v365 = vunpack.c.l.b16 %v239
    %v366 = vunpack.c.l.b16 %v240
    %v367 = vunpack.c.h.b16 %v240
    %v368 = vunpack.c.l.b16 %v241
    %v369 = vunpack.c.h.b16 %v241
    %v370 = vunpack.c.l.b16 %v242
    %v371 = vpack.c.b16 %v296, %v291
    %v372 = vpack.c.b16 %v297, %v292
    %v373 = vpack.c.b16 %v298, %v293
    %v374 = vpack.c.b16 %v299, %v294
    %v375 = vpack.c.b16 %v300, %v295
    %v376 = vpack.c.b16 %v306, %v301
    %v377 = vpack.c.b16 %v307, %v302
    %v378 = vpack.c.b16 %v308, %v303
    %v379 = vpack.c.b16 %v309, %v304
    %v380 = vpack.c.b16 %v310, %v305
    %v381 = vpack.c.b16 %v316, %v311
    %v382 = vpack.c.b16 %v317, %v312
    %v383 = vpack.c.b16 %v318, %v313
    %v384 = vpack.c.b16 %v319, %v314
    %v385 = vpack.c.b16 %v320, %v315
    %v386 = vpack.c.b16 %v326, %v321
    %v387 = vpack.c.b16 %v327, %v322
    %v388 = vpack.c.b16 %v328, %v323
    %v389 = vpack.c.b16 %v329, %v324
    %v390 = vpack.c.b16 %v330, %v325
    %v391 = vpack.c.b16 %v336, %v331
    %v392 = vpack.c.b16 %v337, %v332
    %v393 = vpack.c.b16 %v338, %v333
    %v394 = vpack.c.b16 %v339, %v334
    %v395 = vpack.c.b16 %v340, %v335
    %v396 = vpack.c.b16 %v346, %v341
    %v397 = vpack.c.b16 %v347, %v342
    %v398 = vpack.c.b16 %v348, %v343
    %v399 = vpack.c.b16 %v349, %v344
    %v400 = vpack.c.b16 %v350, %v345
    %v401 = vpack.c.b16 %v356, %v351
    %v402 = vpack.c.b16 %v357, %v352
    %v403 = vpack.c.b16 %v358, %v353
    %v404 = vpack.c.b16 %v359, %v354
    %v405 = vpack.c.b16 %v360, %v355
    %v406 = vpack.c.b16 %v366, %v361
    %v407 = vpack.c.b16 %v367, %v362
    %v408 = vpack.c.b16 %v368, %v363
    %v409 = vpack.c.b16 %v369, %v364
    %v410 = vpack.c.b16 %v370, %v365
    %451 = vmatprep.subr.bf16.mxu0 %v372
    %452 = vmatpush1.bf16.msra.mxu0 %v371
    %453 = vmatprep.subr.bf16.mxu0 %v377
    %454 = vmatpush1.bf16.msra.mxu0 %v376
    %455 = vmatprep.subr.bf16.mxu0 %v382
    %456 = vmatpush1.bf16.msra.mxu0 %v381
    %457 = vmatprep.subr.bf16.mxu0 %v387
    %458 = vmatpush1.bf16.msra.mxu0 %v386
    %459 = vmatprep.subr.bf16.mxu0 %v392
    %460 = vmatpush1.bf16.msra.mxu0 %v391
    %461 = vmatprep.subr.bf16.mxu0 %v397
    %462 = vmatpush1.bf16.msra.mxu0 %v396
    %463 = vmatprep.subr.bf16.mxu0 %v402
    %464 = vmatpush1.bf16.msra.mxu0 %v401
    %465 = vmatprep.subr.bf16.mxu0 %v407
    %466 = vmatpush1.bf16.msra.mxu0 %v406
    %467 = vmatprep.subr.bf16.mxu0 0
    %468 = vmatpush1.bf16.msra.mxu0 0
    %469 = vmatprep.subr.bf16.mxu0 0
    %470 = vmatpush1.bf16.msra.mxu0 0
    %471 = vmatprep.subr.bf16.mxu0 0
    %472 = vmatpush1.bf16.msra.mxu0 0
    %473 = vmatprep.subr.bf16.mxu0 0
    %474 = vmatpush1.bf16.msra.mxu0 0
    %475 = vmatprep.subr.bf16.mxu0 0
    %476 = vmatpush1.bf16.msra.mxu0 0
    %477 = vmatprep.subr.bf16.mxu0 0
    %478 = vmatpush1.bf16.msra.mxu0 0
    %479 = vmatprep.subr.bf16.mxu0 0
    %480 = vmatpush1.bf16.msra.mxu0 0
    %481 = vmatprep.subr.bf16.mxu0 0
    %482 = vmatpush1.bf16.msra.mxu0 0
    %483 = vmatprep.mubr.bf16.mxu0 0
    %484 = vmatmul.mubr.bf16.gmra.mrb[0].mxu0 %v124
    %v485 = vpop.f32.mrb[0].mxu0
    %v486 = vadd.f32 0.0, %v485
    %v487 = vpop.f32.mrb[0].mxu0
    %v488 = vadd.f32 0.0, %v487
    %v489 = vpop.f32.mrb[0].mxu0
    %v490 = vpop.f32.mrb[0].mxu0
    %491 = vdwg.mxu0
    %492 = vmatprep.subr.bf16.mxu0 %v374
    %493 = vmatpush1.bf16.msra.mxu0 %v373
    %494 = vmatprep.subr.bf16.mxu0 %v379
    %495 = vmatpush1.bf16.msra.mxu0 %v378
    %496 = vmatprep.subr.bf16.mxu0 %v384
    %497 = vmatpush1.bf16.msra.mxu0 %v383
    %498 = vmatprep.subr.bf16.mxu0 %v389
    %499 = vmatpush1.bf16.msra.mxu0 %v388
    %500 = vmatprep.subr.bf16.mxu0 %v394
    %501 = vmatpush1.bf16.msra.mxu0 %v393
    %502 = vmatprep.subr.bf16.mxu0 %v399
    %503 = vmatpush1.bf16.msra.mxu0 %v398
    %504 = vmatprep.subr.bf16.mxu0 %v404
    %505 = vmatpush1.bf16.msra.mxu0 %v403
    %506 = vmatprep.subr.bf16.mxu0 %v409
    %507 = vmatpush1.bf16.msra.mxu0 %v408
    %508 = vmatprep.subr.bf16.mxu0 0
    %509 = vmatpush1.bf16.msra.mxu0 0
    %510 = vmatprep.subr.bf16.mxu0 0
    %511 = vmatpush1.bf16.msra.mxu0 0
    %512 = vmatprep.subr.bf16.mxu0 0
    %513 = vmatpush1.bf16.msra.mxu0 0
    %514 = vmatprep.subr.bf16.mxu0 0
    %515 = vmatpush1.bf16.msra.mxu0 0
    %516 = vmatprep.subr.bf16.mxu0 0
    %517 = vmatpush1.bf16.msra.mxu0 0
    %518 = vmatprep.subr.bf16.mxu0 0
    %519 = vmatpush1.bf16.msra.mxu0 0
    %520 = vmatprep.subr.bf16.mxu0 0
    %521 = vmatpush1.bf16.msra.mxu0 0
    %522 = vmatprep.subr.bf16.mxu0 0
    %523 = vmatpush1.bf16.msra.mxu0 0
    %524 = vmatprep.mubr.bf16.mxu0 0
    %525 = vmatmul.mubr.bf16.gmra.mrb[0].mxu0 %v124
    %v526 = vpop.f32.mrb[0].mxu0
    %v527 = vadd.f32 0.0, %v526
    %v528 = vpop.f32.mrb[0].mxu0
    %v529 = vadd.f32 0.0, %v528
    %v530 = vpop.f32.mrb[0].mxu0
    %v531 = vpop.f32.mrb[0].mxu0
    %532 = vdwg.mxu0
    %533 = vmatprep.subr.bf16.mxu0 0
    %534 = vmatpush1.bf16.msra.mxu0 %v375
    %535 = vmatprep.subr.bf16.mxu0 0
    %536 = vmatpush1.bf16.msra.mxu0 %v380
    %537 = vmatprep.subr.bf16.mxu0 0
    %538 = vmatpush1.bf16.msra.mxu0 %v385
    %539 = vmatprep.subr.bf16.mxu0 0
    %540 = vmatpush1.bf16.msra.mxu0 %v390
    %541 = vmatprep.subr.bf16.mxu0 0
    %542 = vmatpush1.bf16.msra.mxu0 %v395
    %543 = vmatprep.subr.bf16.mxu0 0
    %544 = vmatpush1.bf16.msra.mxu0 %v400
    %545 = vmatprep.subr.bf16.mxu0 0
    %546 = vmatpush1.bf16.msra.mxu0 %v405
    %547 = vmatprep.subr.bf16.mxu0 0
    %548 = vmatpush1.bf16.msra.mxu0 %v410
    %549 = vmatprep.subr.bf16.mxu0 0
    %550 = vmatpush1.bf16.msra.mxu0 0
    %551 = vmatprep.subr.bf16.mxu0 0
    %552 = vmatpush1.bf16.msra.mxu0 0
    %553 = vmatprep.subr.bf16.mxu0 0
    %554 = vmatpush1.bf16.msra.mxu0 0
    %555 = vmatprep.subr.bf16.mxu0 0
    %556 = vmatpush1.bf16.msra.mxu0 0
    %557 = vmatprep.subr.bf16.mxu0 0
    %558 = vmatpush1.bf16.msra.mxu0 0
    %559 = vmatprep.subr.bf16.mxu0 0
    %560 = vmatpush1.bf16.msra.mxu0 0
    %561 = vmatprep.subr.bf16.mxu0 0
    %562 = vmatpush1.bf16.msra.mxu0 0
    %563 = vmatprep.subr.bf16.mxu0 0
    %564 = vmatpush1.bf16.msra.mxu0 0
    %565 = vmatprep.mubr.bf16.mxu0 0
    %566 = vmatmul.mubr.bf16.gmra.mrb[0].mxu0 %v124
    %v567 = vpop.f32.mrb[0].mxu0
    %v568 = vadd.f32 0.0, %v567
    %v569 = vpop.f32.mrb[0].mxu0
    %v570 = vpop.f32.mrb[0].mxu0
    %v571 = vpop.f32.mrb[0].mxu0
    %572 = vdwg.mxu0
    %v573 = vld [vmem:[%s6] sm:$0x1]
    %v575 = vlaneseq
    %v576 = vshrl.u32 %v575, 7
    %v577 = vsub.s32 0, %v576
    %v578 = vrot.slane %v573, %v577
    %v580 = vadd.f32 %v486, %v578
    %v583 = vunpack.c.l.s4 1966171168
    %v584 = vunpack.c.0.s8 %v583
    %v585 = vlaneseq
    %v586 = vshrl.u32 %v585, 7
    %v587 = vsub.s32 %v584, %v586
    %v588 = vrot.slane %v580, %v587
    %v589 = vcombine.high %v588, %v588
    %v591 = vunpack.c.l.s4 1966171168
    %v592 = vunpack.c.0.s8 %v591
    %v593 = vlaneseq
    %v594 = vshrl.u32 %v593, 7
    %v595 = vsub.s32 %v592, %v594
    %v596 = vrot.slane %v588, %v595
    %v598 = vunpack.c.l.s4 1966171168
    %v599 = vunpack.c.0.s8 %v598
    %v600 = vlaneseq
    %v601 = vshrl.u32 %v600, 7
    %v602 = vsub.s32 %v599, %v601
    %v603 = vrot.slane %v589, %v602
    %v604 = vlaneseq
    %v605 = vshrl.u32 %v604, 7
    %v606 = vsub.s32 0, %v605
    %v607 = vrot.slane %v596, %v606
    %v608 = vlaneseq
    %v609 = vshrl.u32 %v608, 7
    %v610 = vsub.s32 0, %v609
    %v611 = vrot.slane %v603, %v610
    %v614 = vadd.f32 %v189, %v607
    %v615 = vadd.f32 %v192, %v611
    %v616 = vtanh.pop %v614
    %v617 = vtanh.pop %v615
    %v618 = vld [vmem:[%s7] sm:$0x1]
    %v620 = vlaneseq
    %v621 = vshrl.u32 %v620, 7
    %v622 = vsub.s32 0, %v621
    %v623 = vrot.slane %v618, %v622
    %v625 = vmul.f32 %v616, %v623
    %v626 = vmul.f32 %v617, %v623
    %627 = vadd.xlane.f32.xlu0 %v625
    %v628 = vpop.xlane.xlu0 %627
    %629 = vadd.xlane.f32.xlu0 %v626
    %v630 = vpop.xlane.xlu0 %629
    %v633 = vlaneseq
    %v634 = vand.u32 %v633, 127
    %v635 = vlaneseq
    %v636 = vshrl.u32 %v635, 7
    %v637 = vsub.s32 %v634, %v636
    %v638 = vrot.slane %v628, %v637
    %v639 = vlaneseq
    %v640 = vshrl.u32 %v639, 7
    %v641 = vsub.s32 %v634, %v640
    %v642 = vrot.slane %v630, %v641
    %vm643 = vcmask 1041409
    %v644 = vsel %vm643, %v642, %v638
    %vm646 = vcmask 58368
    %v647 = vsel %vm646, %v644, -inf
    %648 = vmax.xlane.f32.xlu0 %v647
    %v649 = vpop.xlane.xlu0 %648
    %v651 = vlaneseq
    %v652 = vshrl.u32 %v651, 7
    %v653 = vsub.s32 0, %v652
    %v654 = vrot.slane %v649, %v653
    %v655 = vlaneseq
    %v656 = vshrl.u32 %v655, 7
    %v657 = vsub.s32 1, %v656
    %v658 = vrot.slane %v649, %v657
    %v661 = vsub.f32 %v628, %v654
    %v662 = vsub.f32 %v630, %v658
    %v663 = vmul.f32 %v661, 1.442695
    %v664 = vpow.pop %v663
    %v665 = vmul.f32 %v662, 1.442695
    %v666 = vpow.pop %v665
    %669 = vset.pattern.permute.xlu0 0
    %670 = vperm.xlu0 %669, %v664
    %v671 = vpop.permute.xlu0 %670
    %672 = vset.pattern.permute.xlu0 0
    %673 = vperm.xlu0 %672, %v666
    %v674 = vpop.permute.xlu0 %673
    %v675 = vlaneseq
    %v676 = vshrl.u32 %v675, 7
    %v677 = vsub.s32 %v634, %v676
    %v678 = vrot.slane %v671, %v677
    %v679 = vlaneseq
    %v680 = vshrl.u32 %v679, 7
    %v681 = vsub.s32 %v634, %v680
    %v682 = vrot.slane %v674, %v681
    %v683 = vsel %vm643, %v682, %v678
    %v685 = vsel %vm646, %v683, 0.0
    %686 = vadd.xlane.f32.xlu0 %v685
    %v687 = vpop.xlane.xlu0 %686
    %v688 = vrcp.pop %v687
    %v690 = vlaneseq
    %v691 = vshrl.u32 %v690, 7
    %v692 = vsub.s32 0, %v691
    %v693 = vrot.slane %v688, %v692
    %v694 = vlaneseq
    %v695 = vshrl.u32 %v694, 7
    %v696 = vsub.s32 1, %v695
    %v697 = vrot.slane %v688, %v696
    %v700 = vmul.f32 %v664, %v693
    %v701 = vmul.f32 %v666, %v697
    %704 = vset.pattern.permute.xlu0 0
    %705 = vperm.xlu0 %704, %v700
    %v706 = vpop.permute.xlu0 %705
    %707 = vset.pattern.permute.xlu0 0
    %708 = vperm.xlu0 %707, %v701
    %v709 = vpop.permute.xlu0 %708
    %v710 = vlaneseq
    %v711 = vshrl.u32 %v710, 7
    %v712 = vsub.s32 %v634, %v711
    %v713 = vrot.slane %v706, %v712
    %v714 = vlaneseq
    %v715 = vshrl.u32 %v714, 7
    %v716 = vsub.s32 %v634, %v715
    %v717 = vrot.slane %v709, %v716
    %v718 = vsel %vm643, %v717, %v713
    %720 = vst.msk [vmem:[#allocation16] sm:$0x3] %vm646, %v718
    %v721 = vunpack.c.l.bf16 %v126
    %v722 = vunpack.c.l.bf16 %v127
    %v725 = vmul.f32 %v706, %v721
    %v726 = vmul.f32 %v709, %v722
    %v727 = vsel %vm150, %v725, 0.0
    %v728 = vrot.slane %v727, 4
    %v729 = vadd.f32 %v727, %v728
    %v730 = vrot.slane %v729, 2
    %v731 = vadd.f32 %v729, %v730
    %v732 = vrot.slane %v731, 1
    %v733 = vadd.f32 %v731, %v732
    %v734 = vsel %vm150, %v726, 0.0
    %v735 = vrot.slane %v734, 4
    %v736 = vadd.f32 %v734, %v735
    %v737 = vrot.slane %v736, 2
    %v738 = vadd.f32 %v736, %v737
    %v739 = vrot.slane %v738, 1
    %v740 = vadd.f32 %v738, %v739
    %v741 = vpack.c.bf16 %v733, %v733
    %v742 = vpack.c.bf16 %v740, %v740
    %v743 = vld [vmem:[#allocation10] sm:$0xff]
    %v744 = vld [vmem:[#allocation10 + $0x8] sm:$0xff]
    %v745 = vld [vmem:[#allocation10 + $0x10] sm:$0xff]
    %v746 = vld [vmem:[#allocation10 + $0x18] sm:$0xff]
    %v747 = vld [vmem:[#allocation10 + $0x20] sm:$0xff]
    %v748 = vld [vmem:[#allocation10 + $0x28] sm:$0xff]
    %v749 = vld [vmem:[#allocation10 + $0x30] sm:$0xff]
    %v750 = vld [vmem:[#allocation10 + $0x38] sm:$0xff]
    %v751 = vld [vmem:[#allocation11] sm:$0xff]
    %v752 = vld [vmem:[#allocation11 + $0x8] sm:$0xff]
    %v753 = vld [vmem:[#allocation11 + $0x10] sm:$0xff]
    %v754 = vld [vmem:[#allocation11 + $0x18] sm:$0xff]
    %v755 = vld [vmem:[#allocation11 + $0x20] sm:$0xff]
    %v756 = vld [vmem:[#allocation11 + $0x28] sm:$0xff]
    %v757 = vld [vmem:[#allocation11 + $0x30] sm:$0xff]
    %v758 = vld [vmem:[#allocation11 + $0x38] sm:$0xff]
    %v767 = vunpack.c.l.b16 %v751
    %v768 = vunpack.c.h.b16 %v751
    %v769 = vunpack.c.l.b16 %v752
    %v770 = vunpack.c.h.b16 %v752
    %v771 = vunpack.c.l.b16 %v753
    %v772 = vunpack.c.h.b16 %v753
    %v773 = vunpack.c.l.b16 %v754
    %v774 = vunpack.c.h.b16 %v754
    %v775 = vunpack.c.l.b16 %v755
    %v776 = vunpack.c.h.b16 %v755
    %v777 = vunpack.c.l.b16 %v756
    %v778 = vunpack.c.h.b16 %v756
    %v779 = vunpack.c.l.b16 %v757
    %v780 = vunpack.c.h.b16 %v757
    %v781 = vunpack.c.l.b16 %v758
    %v782 = vunpack.c.h.b16 %v758
    %v783 = vpack.c.b16 %v771, %v767
    %v784 = vpack.c.b16 %v772, %v768
    %v785 = vpack.c.b16 %v773, %v769
    %v786 = vpack.c.b16 %v774, %v770
    %v787 = vpack.c.b16 %v779, %v775
    %v788 = vpack.c.b16 %v780, %v776
    %v789 = vpack.c.b16 %v781, %v777
    %v790 = vpack.c.b16 %v782, %v778
    %v800 = vsel %vm150, %v128, 0
    %802 = vmatprep.subr.bf16.mxu0 %v784
    %803 = vmatpush1.bf16.msra.mxu0 %v783
    %804 = vmatprep.subr.bf16.mxu0 %v788
    %805 = vmatpush1.bf16.msra.mxu0 %v787
    %806 = vmatprep.subr.bf16.mxu0 0
    %807 = vmatpush1.bf16.msra.mxu0 0
    %808 = vmatprep.subr.bf16.mxu0 0
    %809 = vmatpush1.bf16.msra.mxu0 0
    %810 = vmatprep.subr.bf16.mxu0 0
    %811 = vmatpush1.bf16.msra.mxu0 0
    %812 = vmatprep.subr.bf16.mxu0 0
    %813 = vmatpush1.bf16.msra.mxu0 0
    %814 = vmatprep.subr.bf16.mxu0 0
    %815 = vmatpush1.bf16.msra.mxu0 0
    %816 = vmatprep.subr.bf16.mxu0 0
    %817 = vmatpush1.bf16.msra.mxu0 0
    %818 = vmatprep.subr.bf16.mxu0 0
    %819 = vmatpush1.bf16.msra.mxu0 0
    %820 = vmatprep.subr.bf16.mxu0 0
    %821 = vmatpush1.bf16.msra.mxu0 0
    %822 = vmatprep.subr.bf16.mxu0 0
    %823 = vmatpush1.bf16.msra.mxu0 0
    %824 = vmatprep.subr.bf16.mxu0 0
    %825 = vmatpush1.bf16.msra.mxu0 0
    %826 = vmatprep.subr.bf16.mxu0 0
    %827 = vmatpush1.bf16.msra.mxu0 0
    %828 = vmatprep.subr.bf16.mxu0 0
    %829 = vmatpush1.bf16.msra.mxu0 0
    %830 = vmatprep.subr.bf16.mxu0 0
    %831 = vmatpush1.bf16.msra.mxu0 0
    %832 = vmatprep.subr.bf16.mxu0 0
    %833 = vmatpush1.bf16.msra.mxu0 0
    %834 = vmatprep.mubr.bf16.mxu0 0
    %835 = vmatmul.mubr.bf16.gmra.mrb[0].mxu0 %v800
    %v836 = vpop.f32.mrb[0].mxu0
    %v837 = vadd.f32 0.0, %v836
    %v838 = vpop.f32.mrb[0].mxu0
    %v839 = vadd.f32 0.0, %v838
    %v840 = vpop.f32.mrb[0].mxu0
    %v841 = vpop.f32.mrb[0].mxu0
    %842 = vdwg.mxu0
    %843 = vmatprep.subr.bf16.mxu0 %v786
    %844 = vmatpush1.bf16.msra.mxu0 %v785
    %845 = vmatprep.subr.bf16.mxu0 %v790
    %846 = vmatpush1.bf16.msra.mxu0 %v789
    %847 = vmatprep.subr.bf16.mxu0 0
    %848 = vmatpush1.bf16.msra.mxu0 0
    %849 = vmatprep.subr.bf16.mxu0 0
    %850 = vmatpush1.bf16.msra.mxu0 0
    %851 = vmatprep.subr.bf16.mxu0 0
    %852 = vmatpush1.bf16.msra.mxu0 0
    %853 = vmatprep.subr.bf16.mxu0 0
    %854 = vmatpush1.bf16.msra.mxu0 0
    %855 = vmatprep.subr.bf16.mxu0 0
    %856 = vmatpush1.bf16.msra.mxu0 0
    %857 = vmatprep.subr.bf16.mxu0 0
    %858 = vmatpush1.bf16.msra.mxu0 0
    %859 = vmatprep.subr.bf16.mxu0 0
    %860 = vmatpush1.bf16.msra.mxu0 0
    %861 = vmatprep.subr.bf16.mxu0 0
    %862 = vmatpush1.bf16.msra.mxu0 0
    %863 = vmatprep.subr.bf16.mxu0 0
    %864 = vmatpush1.bf16.msra.mxu0 0
    %865 = vmatprep.subr.bf16.mxu0 0
    %866 = vmatpush1.bf16.msra.mxu0 0
    %867 = vmatprep.subr.bf16.mxu0 0
    %868 = vmatpush1.bf16.msra.mxu0 0
    %869 = vmatprep.subr.bf16.mxu0 0
    %870 = vmatpush1.bf16.msra.mxu0 0
    %871 = vmatprep.subr.bf16.mxu0 0
    %872 = vmatpush1.bf16.msra.mxu0 0
    %873 = vmatprep.subr.bf16.mxu0 0
    %874 = vmatpush1.bf16.msra.mxu0 0
    %875 = vmatprep.mubr.bf16.mxu0 0
    %876 = vmatmul.mubr.bf16.gmra.mrb[0].mxu0 %v800
    %v877 = vpop.f32.mrb[0].mxu0
    %v878 = vadd.f32 0.0, %v877
    %v879 = vpop.f32.mrb[0].mxu0
    %v880 = vadd.f32 0.0, %v879
    %v881 = vpop.f32.mrb[0].mxu0
    %v882 = vpop.f32.mrb[0].mxu0
    %883 = vdwg.mxu0
    %v886 = vunpack.c.l.b16 %v741
    %v887 = vunpack.c.l.b16 %v742
    %v888 = vsel %vm643, %v887, %v886
    %v889 = vpack.c.b16 %v888, %v888
    %v898 = vunpack.c.l.b16 %v743
    %v899 = vunpack.c.h.b16 %v743
    %v900 = vunpack.c.l.b16 %v744
    %v901 = vunpack.c.h.b16 %v744
    %v902 = vunpack.c.l.b16 %v745
    %v903 = vunpack.c.h.b16 %v745
    %v904 = vunpack.c.l.b16 %v746
    %v905 = vunpack.c.h.b16 %v746
    %v906 = vunpack.c.l.b16 %v747
    %v907 = vunpack.c.h.b16 %v747
    %v908 = vunpack.c.l.b16 %v748
    %v909 = vunpack.c.h.b16 %v748
    %v910 = vunpack.c.l.b16 %v749
    %v911 = vunpack.c.h.b16 %v749
    %v912 = vunpack.c.l.b16 %v750
    %v913 = vunpack.c.h.b16 %v750
    %v914 = vpack.c.b16 %v902, %v898
    %v915 = vpack.c.b16 %v903, %v899
    %v916 = vpack.c.b16 %v904, %v900
    %v917 = vpack.c.b16 %v905, %v901
    %v918 = vpack.c.b16 %v910, %v906
    %v919 = vpack.c.b16 %v911, %v907
    %v920 = vpack.c.b16 %v912, %v908
    %v921 = vpack.c.b16 %v913, %v909
    %v931 = vsel %vm150, %v889, 0
    %933 = vmatprep.subr.bf16.mxu0 %v915
    %934 = vmatpush1.bf16.msra.mxu0 %v914
    %935 = vmatprep.subr.bf16.mxu0 %v919
    %936 = vmatpush1.bf16.msra.mxu0 %v918
    %937 = vmatprep.subr.bf16.mxu0 0
    %938 = vmatpush1.bf16.msra.mxu0 0
    %939 = vmatprep.subr.bf16.mxu0 0
    %940 = vmatpush1.bf16.msra.mxu0 0
    %941 = vmatprep.subr.bf16.mxu0 0
    %942 = vmatpush1.bf16.msra.mxu0 0
    %943 = vmatprep.subr.bf16.mxu0 0
    %944 = vmatpush1.bf16.msra.mxu0 0
    %945 = vmatprep.subr.bf16.mxu0 0
    %946 = vmatpush1.bf16.msra.mxu0 0
    %947 = vmatprep.subr.bf16.mxu0 0
    %948 = vmatpush1.bf16.msra.mxu0 0
    %949 = vmatprep.subr.bf16.mxu0 0
    %950 = vmatpush1.bf16.msra.mxu0 0
    %951 = vmatprep.subr.bf16.mxu0 0
    %952 = vmatpush1.bf16.msra.mxu0 0
    %953 = vmatprep.subr.bf16.mxu0 0
    %954 = vmatpush1.bf16.msra.mxu0 0
    %955 = vmatprep.subr.bf16.mxu0 0
    %956 = vmatpush1.bf16.msra.mxu0 0
    %957 = vmatprep.subr.bf16.mxu0 0
    %958 = vmatpush1.bf16.msra.mxu0 0
    %959 = vmatprep.subr.bf16.mxu0 0
    %960 = vmatpush1.bf16.msra.mxu0 0
    %961 = vmatprep.subr.bf16.mxu0 0
    %962 = vmatpush1.bf16.msra.mxu0 0
    %963 = vmatprep.subr.bf16.mxu0 0
    %964 = vmatpush1.bf16.msra.mxu0 0
    %965 = vmatprep.mubr.bf16.mxu0 0
    %966 = vmatmul.mubr.bf16.gmra.mrb[0].mxu0 %v931
    %v967 = vpop.f32.mrb[0].mxu0
    %v968 = vadd.f32 %v837, %v967
    %v969 = vpop.f32.mrb[0].mxu0
    %v970 = vadd.f32 %v839, %v969
    %v971 = vpop.f32.mrb[0].mxu0
    %v972 = vpop.f32.mrb[0].mxu0
    %973 = vdwg.mxu0
    %974 = vmatprep.subr.bf16.mxu0 %v917
    %975 = vmatpush1.bf16.msra.mxu0 %v916
    %976 = vmatprep.subr.bf16.mxu0 %v921
    %977 = vmatpush1.bf16.msra.mxu0 %v920
    %978 = vmatprep.subr.bf16.mxu0 0
    %979 = vmatpush1.bf16.msra.mxu0 0
    %980 = vmatprep.subr.bf16.mxu0 0
    %981 = vmatpush1.bf16.msra.mxu0 0
    %982 = vmatprep.subr.bf16.mxu0 0
    %983 = vmatpush1.bf16.msra.mxu0 0
    %984 = vmatprep.subr.bf16.mxu0 0
    %985 = vmatpush1.bf16.msra.mxu0 0
    %986 = vmatprep.subr.bf16.mxu0 0
    %987 = vmatpush1.bf16.msra.mxu0 0
    %988 = vmatprep.subr.bf16.mxu0 0
    %989 = vmatpush1.bf16.msra.mxu0 0
    %990 = vmatprep.subr.bf16.mxu0 0
    %991 = vmatpush1.bf16.msra.mxu0 0
    %992 = vmatprep.subr.bf16.mxu0 0
    %993 = vmatpush1.bf16.msra.mxu0 0
    %994 = vmatprep.subr.bf16.mxu0 0
    %995 = vmatpush1.bf16.msra.mxu0 0
    %996 = vmatprep.subr.bf16.mxu0 0
    %997 = vmatpush1.bf16.msra.mxu0 0
    %998 = vmatprep.subr.bf16.mxu0 0
    %999 = vmatpush1.bf16.msra.mxu0 0
    %1000 = vmatprep.subr.bf16.mxu0 0
    %1001 = vmatpush1.bf16.msra.mxu0 0
    %1002 = vmatprep.subr.bf16.mxu0 0
    %1003 = vmatpush1.bf16.msra.mxu0 0
    %1004 = vmatprep.subr.bf16.mxu0 0
    %1005 = vmatpush1.bf16.msra.mxu0 0
    %1006 = vmatprep.mubr.bf16.mxu0 0
    %1007 = vmatmul.mubr.bf16.gmra.mrb[0].mxu0 %v931
    %v1008 = vpop.f32.mrb[0].mxu0
    %v1009 = vadd.f32 %v878, %v1008
    %v1010 = vpop.f32.mrb[0].mxu0
    %v1011 = vadd.f32 %v880, %v1010
    %v1012 = vpop.f32.mrb[0].mxu0
    %v1013 = vpop.f32.mrb[0].mxu0
    %1014 = vdwg.mxu0
    %v1015 = vadd.f32 %v968, %v488
    %v1016 = vadd.f32 %v970, %v527
    %v1017 = vadd.f32 %v1009, %v529
    %v1018 = vadd.f32 %v1011, %v568
    %v1019 = vld [vmem:[%s10] sm:$0xf]
    %v1021 = vlaneseq
    %v1022 = vshrl.u32 %v1021, 7
    %v1023 = vsub.s32 0, %v1022
    %v1024 = vrot.slane %v1019, %v1023
    %v1025 = vlaneseq
    %v1026 = vshrl.u32 %v1025, 7
    %v1027 = vsub.s32 1, %v1026
    %v1028 = vrot.slane %v1019, %v1027
    %v1029 = vlaneseq
    %v1030 = vshrl.u32 %v1029, 7
    %v1031 = vsub.s32 2, %v1030
    %v1032 = vrot.slane %v1019, %v1031
    %v1033 = vlaneseq
    %v1034 = vshrl.u32 %v1033, 7
    %v1035 = vsub.s32 3, %v1034
    %v1036 = vrot.slane %v1019, %v1035
    %v1041 = vadd.f32 %v1015, %v1024
    %v1042 = vadd.f32 %v1016, %v1028
    %v1043 = vadd.f32 %v1017, %v1032
    %v1044 = vadd.f32 %v1018, %v1036
    %v1045 = vxor.u32 %v1041, 2147483648
    %v1046 = vmul.f32 %v1045, 1.442695
    %v1047 = vpow.pop %v1046
    %v1048 = vadd.f32 %v1047, 1.0
    %v1049 = vrcp.pop %v1048
    %v1050 = vmul.f32 1.0, %v1049
    %v1051 = vxor.u32 %v1042, 2147483648
    %v1052 = vmul.f32 %v1051, 1.442695
    %v1053 = vpow.pop %v1052
    %v1054 = vadd.f32 %v1053, 1.0
    %v1055 = vrcp.pop %v1054
    %v1056 = vmul.f32 1.0, %v1055
    %v1057 = vtanh.pop %v1043
    %v1058 = vxor.u32 %v1044, 2147483648
    %v1059 = vmul.f32 %v1058, 1.442695
    %v1060 = vpow.pop %v1059
    %v1061 = vadd.f32 %v1060, 1.0
    %v1062 = vrcp.pop %v1061
    %v1063 = vmul.f32 1.0, %v1062
    %v1064 = vmul.f32 %v1056, %v125
    %v1065 = vmul.f32 %v1050, %v1057
    %v1066 = vadd.f32 %v1064, %v1065
    %v1067 = vtanh.pop %v1066
    %v1068 = vmul.f32 %v1063, %v1067
    %1069 = vst [vmem:[#allocation13] sm:$0x3] %v1068
    %1070 = vst [vmem:[#allocation14] sm:$0x3] %v1066
    // Predicated region
    $region70: #{tpu_custom_call.1} parent=1 // pred_check
      _
    $region71: #{tpu_custom_call.1} parent=1 // pred_check_branch
      %1072 = sbr.rel (0) target = $region73
    $region72: #{tpu_custom_call.1} parent=1 // pred_region
      %s1074 = ssub.s32 32, 32
      %1075 = vsyncadd [#allocation4], %s1074
      %s1077 = sshll.u32 [#allocation13], 4
      %s1078 = int_to_ptr.vmem [resolvable:$true] %s1077
      %1080 = dma.vmem_to_hbm [thread:$0]  %s1078, 32, %s11, [#allocation4]
    $region73: #{tpu_custom_call.1} parent=1 // pred_fallthru
      _
    // Predicated region
    $region74: #{tpu_custom_call.1} parent=1 // pred_check
      _
    $region75: #{tpu_custom_call.1} parent=1 // pred_check_branch
      %1082 = sbr.rel (0) target = $region77
    $region76: #{tpu_custom_call.1} parent=1 // pred_region
      %s1084 = ssub.s32 32, 32
      %1085 = vsyncadd [#allocation15], %s1084
      %s1087 = sshll.u32 [#allocation14], 4
      %s1088 = int_to_ptr.vmem [resolvable:$true] %s1087
      %1090 = dma.vmem_to_hbm [thread:$0]  %s1088, 32, %s12, [#allocation15]
    $region77: #{tpu_custom_call.1} parent=1 // pred_fallthru
      _
    // Predicated region
    $region78: #{tpu_custom_call.1} parent=1 // pred_check
      _
    $region79: #{tpu_custom_call.1} parent=1 // pred_check_branch
      %1092 = sbr.rel (0) target = $region81
    $region80: #{tpu_custom_call.1} parent=1 // pred_region
      %s1094 = ssub.s32 32, 32
      %1095 = vsyncadd [#allocation15], %s1094
      %s1097 = sshll.u32 [#allocation16], 4
      %s1098 = int_to_ptr.vmem [resolvable:$true] %s1097
      %1100 = dma.vmem_to_hbm [thread:$0]  %s1098, 32, %s13, [#allocation15]
    $region81: #{tpu_custom_call.1} parent=1 // pred_fallthru
      _
    // Predicated region
    $region82: #{tpu_custom_call.1} parent=1 // pred_check
      _
    $region83: #{tpu_custom_call.1} parent=1 // pred_check_branch
      %1102 = sbr.rel (0) target = $region85
    $region84: #{tpu_custom_call.1} parent=1 // pred_region
      %1103 = dma.done [#allocation4], 32
    $region85: #{tpu_custom_call.1} parent=1 // pred_fallthru
      _
    // Predicated region
    $region86: #{tpu_custom_call.1} parent=1 // pred_check
      _
    $region87: #{tpu_custom_call.1} parent=1 // pred_check_branch
      %1105 = sbr.rel (0) target = $region89
    $region88: #{tpu_custom_call.1} parent=1 // pred_region
      %1106 = dma.done [#allocation15], 32
    $region89: #{tpu_custom_call.1} parent=1 // pred_fallthru
      _
    // Predicated region
    $region90: #{tpu_custom_call.1} parent=1 // pred_check
      _
    $region91: #{tpu_custom_call.1} parent=1 // pred_check_branch
      %1108 = sbr.rel (0) target = $region93
    $region92: #{tpu_custom_call.1} parent=1 // pred_region
      %1109 = dma.done [#allocation15], 32
    $region93: #{tpu_custom_call.1} parent=1 // pred_fallthru
      _
    %1110 = vsyncpa [#allocation3], 1
    %1111 = vsyncpa [#allocation6], 1
    %1112 = vsyncpa [#allocation9], 1
    %1113 = vsyncpa [#allocation12], 1
    %1114 = vsyncpa [#allocation4], 1
    %1115 = vsyncpa [#allocation15], 1

// kernel: tpu_custom_call.1
$region0: #{tpu_custom_call.1}
  #allocation0 [shape = 'u32[]', space=smem, size = 0x4, offset = 0x4, fixed_abs, tag = 'smem constant byte address 0x4 - core index']
  #allocation1 [shape = 'u32[144,128]{1,0:T(1,128)}', space=vmem, size = 0x12000, scoped, tag = 'internal scratch']
  %s0 = inlined_call_operand.hbm [shape: bf16[2,128], index: 0, kind: input, shape index: {}]
  %s1 = inlined_call_operand.vmem [shape: f32[2,128], index: 1, kind: input, shape index: {}]
  %s2 = inlined_call_operand.hbm [shape: bf16[2,8,32], index: 2, kind: input, shape index: {}]
  %s3 = inlined_call_operand.vmem [shape: bf16[2,32], index: 3, kind: input, shape index: {}]
  %s4 = inlined_call_operand.hbm [shape: bf16[32,128], index: 4, kind: input, shape index: {}]
  %s5 = inlined_call_operand.hbm [shape: bf16[128,640], index: 5, kind: input, shape index: {}]
  %s6 = inlined_call_operand.vmem [shape: f32[1,128], index: 6, kind: input, shape index: {}]
  %s7 = inlined_call_operand.vmem [shape: f32[1,128], index: 7, kind: input, shape index: {}]
  %s8 = inlined_call_operand.hbm [shape: bf16[32,512], index: 8, kind: input, shape index: {}]
  %s9 = inlined_call_operand.hbm [shape: bf16[32,512], index: 9, kind: input, shape index: {}]
  %s10 = inlined_call_operand.vmem [shape: f32[1,512], index: 10, kind: input, shape index: {}]
  %s11 = inlined_call_operand.hbm [shape: f32[2,128], index: 11, kind: output, shape index: {0}]
  %s12 = inlined_call_operand.hbm [shape: f32[2,128], index: 12, kind: output, shape index: {1}]
  %s13 = inlined_call_operand.hbm [shape: f32[2,8], index: 13, kind: output, shape index: {2}]
  %14 = xla_tuple %s11, %s12, %s13
  %s15 = sld [smem:[#allocation0]]
  $region94: #{tpu_custom_call.1} parent=0
    _
  %s17 = ssub.s32 1, %s15
  %s18 = scalar_select 0, %s17, %s15
  $region1: #{tpu_custom_call.1} parent=0
    #allocation2 [shape = 'u8[512]{0}', space=vmem, size = 0x400, scoped, tag = 'input window, operand 0, single buffered']
    #allocation3 [shape = 's32[1]{0}', space=sflag, size = 0x4, scoped, tag = 'scoped memory for tpu_custom_call.1']
    #allocation4 [shape = 's32[1]{0}', space=sflag, size = 0x4, scoped, tag = 'scoped memory for tpu_custom_call.1']
    #allocation5 [shape = 'u8[4096]{0}', space=vmem, size = 0x1000, scoped, tag = 'input window, operand 2, single buffered']
    #allocation6 [shape = 's32[1]{0}', space=sflag, size = 0x4, scoped, tag = 'scoped memory for tpu_custom_call.1']
    #allocation7 [shape = 'u8[8192]{0}', space=vmem, size = 0x2000, scoped, tag = 'input window, operand 4, single buffered']
    #allocation8 [shape = 'u8[163840]{0}', space=vmem, size = 0x28000, scoped, tag = 'input window, operand 5, single buffered']
    #allocation9 [shape = 's32[1]{0}', space=sflag, size = 0x4, scoped, tag = 'scoped memory for tpu_custom_call.1']
    #allocation10 [shape = 'u8[32768]{0}', space=vmem, size = 0x8000, scoped, tag = 'input window, operand 8, single buffered']
    #allocation11 [shape = 'u8[32768]{0}', space=vmem, size = 0x8000, scoped, tag = 'input window, operand 9, single buffered']
    #allocation12 [shape = 's32[1]{0}', space=sflag, size = 0x4, scoped, tag = 'scoped memory for tpu_custom_call.1']
    #allocation13 [shape = 'u8[1024]{0}', space=vmem, size = 0x400, scoped, tag = 'output window, operand 0, single buffered']
    #allocation14 [shape = 'u8[1024]{0}', space=vmem, size = 0x400, scoped, tag = 'output window, operand 1, single buffered']
    #allocation15 [shape = 's32[1]{0}', space=sflag, size = 0x4, scoped, tag = 'scoped memory for tpu_custom_call.1']
    #allocation16 [shape = 'u8[1024]{0}', space=vmem, size = 0x400, scoped, tag = 'output window, operand 2, single buffered']
    %19 = vsyncpa [#allocation3], 0
    %20 = vsyncpa [#allocation6], 0
    %21 = vsyncpa [#allocation9], 0
    %22 = vsyncpa [#allocation12], 0
    %23 = vsyncpa [#allocation4], 0
    %24 = vsyncpa [#allocation15], 0
    // Predicated region
    $region2: #{tpu_custom_call.1} parent=1 // pred_check
      _
    $region3: #{tpu_custom_call.1} parent=1 // pred_check_branch
      %26 = sbr.rel (0) target = $region5
    $region4: #{tpu_custom_call.1} parent=1 // pred_region
      %s28 = ssub.s32 16, 16
      %29 = vsyncadd [#allocation3], %s28
      %s31 = sshll.u32 [#allocation2], 4
      %s32 = int_to_ptr.vmem [resolvable:$true] %s31
      %34 = dma.hbm_to_vmem [thread:$0]  %s0, 16, %s32, [#allocation3]
    $region5: #{tpu_custom_call.1} parent=1 // pred_fallthru
      _
    // Predicated region
    $region6: #{tpu_custom_call.1} parent=1 // pred_check
      _
    $region7: #{tpu_custom_call.1} parent=1 // pred_check_branch
      %36 = sbr.rel (0) target = $region9
    $region8: #{tpu_custom_call.1} parent=1 // pred_region
      _
    $region9: #{tpu_custom_call.1} parent=1 // pred_fallthru
      _
    // Predicated region
    $region10: #{tpu_custom_call.1} parent=1 // pred_check
      _
    $region11: #{tpu_custom_call.1} parent=1 // pred_check_branch
      %38 = sbr.rel (0) target = $region13
    $region12: #{tpu_custom_call.1} parent=1 // pred_region
      %s40 = ssub.s32 128, 128
      %41 = vsyncadd [#allocation6], %s40
      %s42 = sshll.u32 [#allocation5], 4
      %s43 = int_to_ptr.vmem [resolvable:$true] %s42
      %48 = dma.hbm_to_vmem [thread:$0]  %s2, 128, %s43, [#allocation6], 64, 64, 4
    $region13: #{tpu_custom_call.1} parent=1 // pred_fallthru
      _
    // Predicated region
    $region14: #{tpu_custom_call.1} parent=1 // pred_check
      _
    $region15: #{tpu_custom_call.1} parent=1 // pred_check_branch
      %50 = sbr.rel (0) target = $region17
    $region16: #{tpu_custom_call.1} parent=1 // pred_region
      _
    $region17: #{tpu_custom_call.1} parent=1 // pred_fallthru
      _
    // Predicated region
    $region18: #{tpu_custom_call.1} parent=1 // pred_check
      _
    $region19: #{tpu_custom_call.1} parent=1 // pred_check_branch
      %52 = sbr.rel (0) target = $region21
    $region20: #{tpu_custom_call.1} parent=1 // pred_region
      %s54 = ssub.s32 256, 256
      %55 = vsyncadd [#allocation6], %s54
      %s56 = sshll.u32 [#allocation7], 4
      %s57 = int_to_ptr.vmem [resolvable:$true] %s56
      %62 = dma.hbm_to_vmem [thread:$0]  %s4, 256, %s57, [#allocation6], 64, 64, 4
    $region21: #{tpu_custom_call.1} parent=1 // pred_fallthru
      _
    // Predicated region
    $region22: #{tpu_custom_call.1} parent=1 // pred_check
      _
    $region23: #{tpu_custom_call.1} parent=1 // pred_check_branch
      %64 = sbr.rel (0) target = $region25
    $region24: #{tpu_custom_call.1} parent=1 // pred_region
      %s66 = ssub.s32 5120, 5120
      %67 = vsyncadd [#allocation9], %s66
      %s68 = sshll.u32 [#allocation8], 4
      %s69 = int_to_ptr.vmem [resolvable:$true] %s68
      %74 = dma.hbm_to_vmem [thread:$0]  %s5, 5120, %s69, [#allocation9], 320, 320, 20
    $region25: #{tpu_custom_call.1} parent=1 // pred_fallthru
      _
    // Predicated region
    $region26: #{tpu_custom_call.1} parent=1 // pred_check
      _
    $region27: #{tpu_custom_call.1} parent=1 // pred_check_branch
      %76 = sbr.rel (0) target = $region29
    $region28: #{tpu_custom_call.1} parent=1 // pred_region
      _
    $region29: #{tpu_custom_call.1} parent=1 // pred_fallthru
      _
    // Predicated region
    $region30: #{tpu_custom_call.1} parent=1 // pred_check
      _
    $region31: #{tpu_custom_call.1} parent=1 // pred_check_branch
      %78 = sbr.rel (0) target = $region33
    $region32: #{tpu_custom_call.1} parent=1 // pred_region
      _
    $region33: #{tpu_custom_call.1} parent=1 // pred_fallthru
      _
    // Predicated region
    $region34: #{tpu_custom_call.1} parent=1 // pred_check
      _
    $region35: #{tpu_custom_call.1} parent=1 // pred_check_branch
      %80 = sbr.rel (0) target = $region37
    $region36: #{tpu_custom_call.1} parent=1 // pred_region
      %s82 = ssub.s32 1024, 1024
      %83 = vsyncadd [#allocation9], %s82
      %s84 = sshll.u32 [#allocation10], 4
      %s85 = int_to_ptr.vmem [resolvable:$true] %s84
      %90 = dma.hbm_to_vmem [thread:$0]  %s8, 1024, %s85, [#allocation9], 256, 256, 16
    $region37: #{tpu_custom_call.1} parent=1 // pred_fallthru
      _
    // Predicated region
    $region38: #{tpu_custom_call.1} parent=1 // pred_check
      _
    $region39: #{tpu_custom_call.1} parent=1 // pred_check_branch
      %92 = sbr.rel (0) target = $region41
    $region40: #{tpu_custom_call.1} parent=1 // pred_region
      %s94 = ssub.s32 1024, 1024
      %95 = vsyncadd [#allocation12], %s94
      %s96 = sshll.u32 [#allocation11], 4
      %s97 = int_to_ptr.vmem [resolvable:$true] %s96
      %102 = dma.hbm_to_vmem [thread:$0]  %s9, 1024, %s97, [#allocation12], 256, 256, 16
    $region41: #{tpu_custom_call.1} parent=1 // pred_fallthru
      _
    // Predicated region
    $region42: #{tpu_custom_call.1} parent=1 // pred_check
      _
    $region43: #{tpu_custom_call.1} parent=1 // pred_check_branch
      %104 = sbr.rel (0) target = $region45
    $region44: #{tpu_custom_call.1} parent=1 // pred_region
      _
    $region45: #{tpu_custom_call.1} parent=1 // pred_fallthru
      _
    // Predicated region
    $region46: #{tpu_custom_call.1} parent=1 // pred_check
      _
    $region47: #{tpu_custom_call.1} parent=1 // pred_check_branch
      %106 = sbr.rel (0) target = $region49
    $region48: #{tpu_custom_call.1} parent=1 // pred_region
      %107 = dma.done [#allocation3], 16
    $region49: #{tpu_custom_call.1} parent=1 // pred_fallthru
      _
    // Predicated region
    $region50: #{tpu_custom_call.1} parent=1 // pred_check
      _
    $region51: #{tpu_custom_call.1} parent=1 // pred_check_branch
      %109 = sbr.rel (0) target = $region53
    $region52: #{tpu_custom_call.1} parent=1 // pred_region
      %110 = dma.done [#allocation6], 128
    $region53: #{tpu_custom_call.1} parent=1 // pred_fallthru
      _
    // Predicated region
    $region54: #{tpu_custom_call.1} parent=1 // pred_check
      _
    $region55: #{tpu_custom_call.1} parent=1 // pred_check_branch
      %112 = sbr.rel (0) target = $region57
    $region56: #{tpu_custom_call.1} parent=1 // pred_region
      %113 = dma.done [#allocation6], 256
    $region57: #{tpu_custom_call.1} parent=1 // pred_fallthru
      _
    // Predicated region
    $region58: #{tpu_custom_call.1} parent=1 // pred_check
      _
    $region59: #{tpu_custom_call.1} parent=1 // pred_check_branch
      %115 = sbr.rel (0) target = $region61
    $region60: #{tpu_custom_call.1} parent=1 // pred_region
      %116 = dma.done [#allocation9], 5120
    $region61: #{tpu_custom_call.1} parent=1 // pred_fallthru
      _
    // Predicated region
    $region62: #{tpu_custom_call.1} parent=1 // pred_check
      _
    $region63: #{tpu_custom_call.1} parent=1 // pred_check_branch
      %118 = sbr.rel (0) target = $region65
    $region64: #{tpu_custom_call.1} parent=1 // pred_region
      %119 = dma.done [#allocation9], 1024
    $region65: #{tpu_custom_call.1} parent=1 // pred_fallthru
      _
    // Predicated region
    $region66: #{tpu_custom_call.1} parent=1 // pred_check
      _
    $region67: #{tpu_custom_call.1} parent=1 // pred_check_branch
      %121 = sbr.rel (0) target = $region69
    $region68: #{tpu_custom_call.1} parent=1 // pred_region
      %122 = dma.done [#allocation12], 1024
    $region69: #{tpu_custom_call.1} parent=1 // pred_fallthru
      _
    %v124 = vld [vmem:[#allocation2] sm:$0x1]
    %v125 = vld [vmem:[%s1] sm:$0x3]
    %v126 = vld [vmem:[#allocation5] sm:$0xf]
    %v127 = vld [vmem:[#allocation5 + $0x4] sm:$0xf]
    %v128 = vld [vmem:[%s3] sm:$0x1]
    %v129 = vld [vmem:[#allocation7] sm:$0xf]
    %v130 = vld [vmem:[#allocation7 + $0x4] sm:$0xf]
    %v131 = vld [vmem:[#allocation7 + $0x8] sm:$0xf]
    %v132 = vld [vmem:[#allocation7 + $0xc] sm:$0xf]
    %v135 = vunpack.c.l.b16 %v126
    %v136 = vunpack.c.l.b16 %v127
    %v137 = vpack.c.b16 %v136, %v135
    %v142 = vunpack.c.l.b16 %v129
    %v143 = vunpack.c.l.b16 %v130
    %v144 = vunpack.c.l.b16 %v131
    %v145 = vunpack.c.l.b16 %v132
    %v146 = vpack.c.b16 %v143, %v142
    %v147 = vpack.c.b16 %v145, %v144
    %vm150 = vcmask 261120
    %v152 = vsel %vm150, %v137, 0
    %154 = vmatprep.subr.bf16.mxu0 0
    %155 = vmatpush1.bf16.msra.mxu0 %v146
    %156 = vmatprep.subr.bf16.mxu0 0
    %157 = vmatpush1.bf16.msra.mxu0 %v147
    %158 = vmatprep.subr.bf16.mxu0 0
    %159 = vmatpush1.bf16.msra.mxu0 0
    %160 = vmatprep.subr.bf16.mxu0 0
    %161 = vmatpush1.bf16.msra.mxu0 0
    %162 = vmatprep.subr.bf16.mxu0 0
    %163 = vmatpush1.bf16.msra.mxu0 0
    %164 = vmatprep.subr.bf16.mxu0 0
    %165 = vmatpush1.bf16.msra.mxu0 0
    %166 = vmatprep.subr.bf16.mxu0 0
    %167 = vmatpush1.bf16.msra.mxu0 0
    %168 = vmatprep.subr.bf16.mxu0 0
    %169 = vmatpush1.bf16.msra.mxu0 0
    %170 = vmatprep.subr.bf16.mxu0 0
    %171 = vmatpush1.bf16.msra.mxu0 0
    %172 = vmatprep.subr.bf16.mxu0 0
    %173 = vmatpush1.bf16.msra.mxu0 0
    %174 = vmatprep.subr.bf16.mxu0 0
    %175 = vmatpush1.bf16.msra.mxu0 0
    %176 = vmatprep.subr.bf16.mxu0 0
    %177 = vmatpush1.bf16.msra.mxu0 0
    %178 = vmatprep.subr.bf16.mxu0 0
    %179 = vmatpush1.bf16.msra.mxu0 0
    %180 = vmatprep.subr.bf16.mxu0 0
    %181 = vmatpush1.bf16.msra.mxu0 0
    %182 = vmatprep.subr.bf16.mxu0 0
    %183 = vmatpush1.bf16.msra.mxu0 0
    %184 = vmatprep.subr.bf16.mxu0 0
    %185 = vmatpush1.bf16.msra.mxu0 0
    %186 = vmatprep.mubr.bf16.mxu0 0
    %187 = vmatmul.mubr.bf16.gmra.mrb[0].mxu0 %v152
    %v188 = vpop.f32.mrb[0].mxu0
    %v189 = vadd.f32 0.0, %v188
    %v190 = vpop.f32.mrb[0].mxu0
    %v191 = vpop.f32.mrb[0].mxu0
    %v192 = vadd.f32 0.0, %v191
    %v193 = vpop.f32.mrb[0].mxu0
    %194 = vdwg.mxu0
    %v195 = vld [vmem:[#allocation8] sm:$0xff]
    %v196 = vld [vmem:[#allocation8 + $0x8] sm:$0xff]
    %v197 = vld [vmem:[#allocation8 + $0x10] sm:$0xf]
    %v198 = vld [vmem:[#allocation8 + $0x14] sm:$0xff]
    %v199 = vld [vmem:[#allocation8 + $0x1c] sm:$0xff]
    %v200 = vld [vmem:[#allocation8 + $0x24] sm:$0xf]
    %v201 = vld [vmem:[#allocation8 + $0x28] sm:$0xff]
    %v202 = vld [vmem:[#allocation8 + $0x30] sm:$0xff]
    %v203 = vld [vmem:[#allocation8 + $0x38] sm:$0xf]
    %v204 = vld [vmem:[#allocation8 + $0x3c] sm:$0xff]
    %v205 = vld [vmem:[#allocation8 + $0x44] sm:$0xff]
    %v206 = vld [vmem:[#allocation8 + $0x4c] sm:$0xf]
    %v207 = vld [vmem:[#allocation8 + $0x50] sm:$0xff]
    %v208 = vld [vmem:[#allocation8 + $0x58] sm:$0xff]
    %v209 = vld [vmem:[#allocation8 + $0x60] sm:$0xf]
    %v210 = vld [vmem:[#allocation8 + $0x64] sm:$0xff]
    %v211 = vld [vmem:[#allocation8 + $0x6c] sm:$0xff]
    %v212 = vld [vmem:[#allocation8 + $0x74] sm:$0xf]
    %v213 = vld [vmem:[#allocation8 + $0x78] sm:$0xff]
    %v214 = vld [vmem:[#allocation8 + $0x80] sm:$0xff]
    %v215 = vld [vmem:[#allocation8 + $0x88] sm:$0xf]
    %v216 = vld [vmem:[#allocation8 + $0x8c] sm:$0xff]
    %v217 = vld [vmem:[#allocation8 + $0x94] sm:$0xff]
    %v218 = vld [vmem:[#allocation8 + $0x9c] sm:$0xf]
    %v219 = vld [vmem:[#allocation8 + $0xa0] sm:$0xff]
    %v220 = vld [vmem:[#allocation8 + $0xa8] sm:$0xff]
    %v221 = vld [vmem:[#allocation8 + $0xb0] sm:$0xf]
    %v222 = vld [vmem:[#allocation8 + $0xb4] sm:$0xff]
    %v223 = vld [vmem:[#allocation8 + $0xbc] sm:$0xff]
    %v224 = vld [vmem:[#allocation8 + $0xc4] sm:$0xf]
    %v225 = vld [vmem:[#allocation8 + $0xc8] sm:$0xff]
    %v226 = vld [vmem:[#allocation8 + $0xd0] sm:$0xff]
    %v227 = vld [vmem:[#allocation8 + $0xd8] sm:$0xf]
    %v228 = vld [vmem:[#allocation8 + $0xdc] sm:$0xff]
    %v229 = vld [vmem:[#allocation8 + $0xe4] sm:$0xff]
    %v230 = vld [vmem:[#allocation8 + $0xec] sm:$0xf]
    %v231 = vld [vmem:[#allocation8 + $0xf0] sm:$0xff]
    %v232 = vld [vmem:[#allocation8 + $0xf8] sm:$0xff]
    %v233 = vld [vmem:[#allocation8 + $0x100] sm:$0xf]
    %v234 = vld [vmem:[#allocation8 + $0x104] sm:$0xff]
    %v235 = vld [vmem:[#allocation8 + $0x10c] sm:$0xff]
    %v236 = vld [vmem:[#allocation8 + $0x114] sm:$0xf]
    %v237 = vld [vmem:[#allocation8 + $0x118] sm:$0xff]
    %v238 = vld [vmem:[#allocation8 + $0x120] sm:$0xff]
    %v239 = vld [vmem:[#allocation8 + $0x128] sm:$0xf]
    %v240 = vld [vmem:[#allocation8 + $0x12c] sm:$0xff]
    %v241 = vld [vmem:[#allocation8 + $0x134] sm:$0xff]
    %v242 = vld [vmem:[#allocation8 + $0x13c] sm:$0xf]
    %v291 = vunpack.c.l.b16 %v195
    %v292 = vunpack.c.h.b16 %v195
    %v293 = vunpack.c.l.b16 %v196
    %v294 = vunpack.c.h.b16 %v196
    %v295 = vunpack.c.l.b16 %v197
    %v296 = vunpack.c.l.b16 %v198
    %v297 = vunpack.c.h.b16 %v198
    %v298 = vunpack.c.l.b16 %v199
    %v299 = vunpack.c.h.b16 %v199
    %v300 = vunpack.c.l.b16 %v200
    %v301 = vunpack.c.l.b16 %v201
    %v302 = vunpack.c.h.b16 %v201
    %v303 = vunpack.c.l.b16 %v202
    %v304 = vunpack.c.h.b16 %v202
    %v305 = vunpack.c.l.b16 %v203
    %v306 = vunpack.c.l.b16 %v204
    %v307 = vunpack.c.h.b16 %v204
    %v308 = vunpack.c.l.b16 %v205
    %v309 = vunpack.c.h.b16 %v205
    %v310 = vunpack.c.l.b16 %v206
    %v311 = vunpack.c.l.b16 %v207
    %v312 = vunpack.c.h.b16 %v207
    %v313 = vunpack.c.l.b16 %v208
    %v314 = vunpack.c.h.b16 %v208
    %v315 = vunpack.c.l.b16 %v209
    %v316 = vunpack.c.l.b16 %v210
    %v317 = vunpack.c.h.b16 %v210
    %v318 = vunpack.c.l.b16 %v211
    %v319 = vunpack.c.h.b16 %v211
    %v320 = vunpack.c.l.b16 %v212
    %v321 = vunpack.c.l.b16 %v213
    %v322 = vunpack.c.h.b16 %v213
    %v323 = vunpack.c.l.b16 %v214
    %v324 = vunpack.c.h.b16 %v214
    %v325 = vunpack.c.l.b16 %v215
    %v326 = vunpack.c.l.b16 %v216
    %v327 = vunpack.c.h.b16 %v216
    %v328 = vunpack.c.l.b16 %v217
    %v329 = vunpack.c.h.b16 %v217
    %v330 = vunpack.c.l.b16 %v218
    %v331 = vunpack.c.l.b16 %v219
    %v332 = vunpack.c.h.b16 %v219
    %v333 = vunpack.c.l.b16 %v220
    %v334 = vunpack.c.h.b16 %v220
    %v335 = vunpack.c.l.b16 %v221
    %v336 = vunpack.c.l.b16 %v222
    %v337 = vunpack.c.h.b16 %v222
    %v338 = vunpack.c.l.b16 %v223
    %v339 = vunpack.c.h.b16 %v223
    %v340 = vunpack.c.l.b16 %v224
    %v341 = vunpack.c.l.b16 %v225
    %v342 = vunpack.c.h.b16 %v225
    %v343 = vunpack.c.l.b16 %v226
    %v344 = vunpack.c.h.b16 %v226
    %v345 = vunpack.c.l.b16 %v227
    %v346 = vunpack.c.l.b16 %v228
    %v347 = vunpack.c.h.b16 %v228
    %v348 = vunpack.c.l.b16 %v229
    %v349 = vunpack.c.h.b16 %v229
    %v350 = vunpack.c.l.b16 %v230
    %v351 = vunpack.c.l.b16 %v231
    %v352 = vunpack.c.h.b16 %v231
    %v353 = vunpack.c.l.b16 %v232
    %v354 = vunpack.c.h.b16 %v232
    %v355 = vunpack.c.l.b16 %v233
    %v356 = vunpack.c.l.b16 %v234
    %v357 = vunpack.c.h.b16 %v234
    %v358 = vunpack.c.l.b16 %v235
    %v359 = vunpack.c.h.b16 %v235
    %v360 = vunpack.c.l.b16 %v236
    %v361 = vunpack.c.l.b16 %v237
    %v362 = vunpack.c.h.b16 %v237
    %v363 = vunpack.c.l.b16 %v238
    %v364 = vunpack.c.h.b16 %v238
    %v365 = vunpack.c.l.b16 %v239
    %v366 = vunpack.c.l.b16 %v240
    %v367 = vunpack.c.h.b16 %v240
    %v368 = vunpack.c.l.b16 %v241
    %v369 = vunpack.c.h.b16 %v241
    %v370 = vunpack.c.l.b16 %v242
    %v371 = vpack.c.b16 %v296, %v291
    %v372 = vpack.c.b16 %v297, %v292
    %v373 = vpack.c.b16 %v298, %v293
    %v374 = vpack.c.b16 %v299, %v294
    %v375 = vpack.c.b16 %v300, %v295
    %v376 = vpack.c.b16 %v306, %v301
    %v377 = vpack.c.b16 %v307, %v302
    %v378 = vpack.c.b16 %v308, %v303
    %v379 = vpack.c.b16 %v309, %v304
    %v380 = vpack.c.b16 %v310, %v305
    %v381 = vpack.c.b16 %v316, %v311
    %v382 = vpack.c.b16 %v317, %v312
    %v383 = vpack.c.b16 %v318, %v313
    %v384 = vpack.c.b16 %v319, %v314
    %v385 = vpack.c.b16 %v320, %v315
    %v386 = vpack.c.b16 %v326, %v321
    %v387 = vpack.c.b16 %v327, %v322
    %v388 = vpack.c.b16 %v328, %v323
    %v389 = vpack.c.b16 %v329, %v324
    %v390 = vpack.c.b16 %v330, %v325
    %v391 = vpack.c.b16 %v336, %v331
    %v392 = vpack.c.b16 %v337, %v332
    %v393 = vpack.c.b16 %v338, %v333
    %v394 = vpack.c.b16 %v339, %v334
    %v395 = vpack.c.b16 %v340, %v335
    %v396 = vpack.c.b16 %v346, %v341
    %v397 = vpack.c.b16 %v347, %v342
    %v398 = vpack.c.b16 %v348, %v343
    %v399 = vpack.c.b16 %v349, %v344
    %v400 = vpack.c.b16 %v350, %v345
    %v401 = vpack.c.b16 %v356, %v351
    %v402 = vpack.c.b16 %v357, %v352
    %v403 = vpack.c.b16 %v358, %v353
    %v404 = vpack.c.b16 %v359, %v354
    %v405 = vpack.c.b16 %v360, %v355
    %v406 = vpack.c.b16 %v366, %v361
    %v407 = vpack.c.b16 %v367, %v362
    %v408 = vpack.c.b16 %v368, %v363
    %v409 = vpack.c.b16 %v369, %v364
    %v410 = vpack.c.b16 %v370, %v365
    %451 = vmatprep.subr.bf16.mxu0 %v372
    %452 = vmatpush1.bf16.msra.mxu0 %v371
    %453 = vmatprep.subr.bf16.mxu0 %v377
    %454 = vmatpush1.bf16.msra.mxu0 %v376
    %455 = vmatprep.subr.bf16.mxu0 %v382
    %456 = vmatpush1.bf16.msra.mxu0 %v381
    %457 = vmatprep.subr.bf16.mxu0 %v387
    %458 = vmatpush1.bf16.msra.mxu0 %v386
    %459 = vmatprep.subr.bf16.mxu0 %v392
    %460 = vmatpush1.bf16.msra.mxu0 %v391
    %461 = vmatprep.subr.bf16.mxu0 %v397
    %462 = vmatpush1.bf16.msra.mxu0 %v396
    %463 = vmatprep.subr.bf16.mxu0 %v402
    %464 = vmatpush1.bf16.msra.mxu0 %v401
    %465 = vmatprep.subr.bf16.mxu0 %v407
    %466 = vmatpush1.bf16.msra.mxu0 %v406
    %467 = vmatprep.subr.bf16.mxu0 0
    %468 = vmatpush1.bf16.msra.mxu0 0
    %469 = vmatprep.subr.bf16.mxu0 0
    %470 = vmatpush1.bf16.msra.mxu0 0
    %471 = vmatprep.subr.bf16.mxu0 0
    %472 = vmatpush1.bf16.msra.mxu0 0
    %473 = vmatprep.subr.bf16.mxu0 0
    %474 = vmatpush1.bf16.msra.mxu0 0
    %475 = vmatprep.subr.bf16.mxu0 0
    %476 = vmatpush1.bf16.msra.mxu0 0
    %477 = vmatprep.subr.bf16.mxu0 0
    %478 = vmatpush1.bf16.msra.mxu0 0
    %479 = vmatprep.subr.bf16.mxu0 0
    %480 = vmatpush1.bf16.msra.mxu0 0
    %481 = vmatprep.subr.bf16.mxu0 0
    %482 = vmatpush1.bf16.msra.mxu0 0
    %483 = vmatprep.mubr.bf16.mxu0 0
    %484 = vmatmul.mubr.bf16.gmra.mrb[0].mxu0 %v124
    %v485 = vpop.f32.mrb[0].mxu0
    %v486 = vadd.f32 0.0, %v485
    %v487 = vpop.f32.mrb[0].mxu0
    %v488 = vadd.f32 0.0, %v487
    %v489 = vpop.f32.mrb[0].mxu0
    %v490 = vpop.f32.mrb[0].mxu0
    %491 = vdwg.mxu0
    %492 = vmatprep.subr.bf16.mxu0 %v374
    %493 = vmatpush1.bf16.msra.mxu0 %v373
    %494 = vmatprep.subr.bf16.mxu0 %v379
    %495 = vmatpush1.bf16.msra.mxu0 %v378
    %496 = vmatprep.subr.bf16.mxu0 %v384
    %497 = vmatpush1.bf16.msra.mxu0 %v383
    %498 = vmatprep.subr.bf16.mxu0 %v389
    %499 = vmatpush1.bf16.msra.mxu0 %v388
    %500 = vmatprep.subr.bf16.mxu0 %v394
    %501 = vmatpush1.bf16.msra.mxu0 %v393
    %502 = vmatprep.subr.bf16.mxu0 %v399
    %503 = vmatpush1.bf16.msra.mxu0 %v398
    %504 = vmatprep.subr.bf16.mxu0 %v404
    %505 = vmatpush1.bf16.msra.mxu0 %v403
    %506 = vmatprep.subr.bf16.mxu0 %v409
    %507 = vmatpush1.bf16.msra.mxu0 %v408
    %508 = vmatprep.subr.bf16.mxu0 0
    %509 = vmatpush1.bf16.msra.mxu0 0
    %510 = vmatprep.subr.bf16.mxu0 0
    %511 = vmatpush1.bf16.msra.mxu0 0
    %512 = vmatprep.subr.bf16.mxu0 0
    %513 = vmatpush1.bf16.msra.mxu0 0
    %514 = vmatprep.subr.bf16.mxu0 0
    %515 = vmatpush1.bf16.msra.mxu0 0
    %516 = vmatprep.subr.bf16.mxu0 0
    %517 = vmatpush1.bf16.msra.mxu0 0
    %518 = vmatprep.subr.bf16.mxu0 0
    %519 = vmatpush1.bf16.msra.mxu0 0
    %520 = vmatprep.subr.bf16.mxu0 0
    %521 = vmatpush1.bf16.msra.mxu0 0
    %522 = vmatprep.subr.bf16.mxu0 0
    %523 = vmatpush1.bf16.msra.mxu0 0
    %524 = vmatprep.mubr.bf16.mxu0 0
    %525 = vmatmul.mubr.bf16.gmra.mrb[0].mxu0 %v124
    %v526 = vpop.f32.mrb[0].mxu0
    %v527 = vadd.f32 0.0, %v526
    %v528 = vpop.f32.mrb[0].mxu0
    %v529 = vadd.f32 0.0, %v528
    %v530 = vpop.f32.mrb[0].mxu0
    %v531 = vpop.f32.mrb[0].mxu0
    %532 = vdwg.mxu0
    %533 = vmatprep.subr.bf16.mxu0 0
    %534 = vmatpush1.bf16.msra.mxu0 %v375
    %535 = vmatprep.subr.bf16.mxu0 0
    %536 = vmatpush1.bf16.msra.mxu0 %v380
    %537 = vmatprep.subr.bf16.mxu0 0
    %538 = vmatpush1.bf16.msra.mxu0 %v385
    %539 = vmatprep.subr.bf16.mxu0 0
    %540 = vmatpush1.bf16.msra.mxu0 %v390
    %541 = vmatprep.subr.bf16.mxu0 0
    %542 = vmatpush1.bf16.msra.mxu0 %v395
    %543 = vmatprep.subr.bf16.mxu0 0
    %544 = vmatpush1.bf16.msra.mxu0 %v400
    %545 = vmatprep.subr.bf16.mxu0 0
    %546 = vmatpush1.bf16.msra.mxu0 %v405
    %547 = vmatprep.subr.bf16.mxu0 0
    %548 = vmatpush1.bf16.msra.mxu0 %v410
    %549 = vmatprep.subr.bf16.mxu0 0
    %550 = vmatpush1.bf16.msra.mxu0 0
    %551 = vmatprep.subr.bf16.mxu0 0
    %552 = vmatpush1.bf16.msra.mxu0 0
    %553 = vmatprep.subr.bf16.mxu0 0
    %554 = vmatpush1.bf16.msra.mxu0 0
    %555 = vmatprep.subr.bf16.mxu0 0
    %556 = vmatpush1.bf16.msra.mxu0 0
    %557 = vmatprep.subr.bf16.mxu0 0
    %558 = vmatpush1.bf16.msra.mxu0 0
    %559 = vmatprep.subr.bf16.mxu0 0
    %560 = vmatpush1.bf16.msra.mxu0 0
    %561 = vmatprep.subr.bf16.mxu0 0
    %562 = vmatpush1.bf16.msra.mxu0 0
    %563 = vmatprep.subr.bf16.mxu0 0
    %564 = vmatpush1.bf16.msra.mxu0 0
    %565 = vmatprep.mubr.bf16.mxu0 0
    %566 = vmatmul.mubr.bf16.gmra.mrb[0].mxu0 %v124
    %v567 = vpop.f32.mrb[0].mxu0
    %v568 = vadd.f32 0.0, %v567
    %v569 = vpop.f32.mrb[0].mxu0
    %v570 = vpop.f32.mrb[0].mxu0
    %v571 = vpop.f32.mrb[0].mxu0
    %572 = vdwg.mxu0
    %v573 = vld [vmem:[%s6] sm:$0x1]
    %v575 = vlaneseq
    %v576 = vshrl.u32 %v575, 7
    %v577 = vsub.s32 0, %v576
    %v578 = vrot.slane %v573, %v577
    %v580 = vadd.f32 %v486, %v578
    %v583 = vunpack.c.l.s4 1966171168
    %v584 = vunpack.c.0.s8 %v583
    %v585 = vlaneseq
    %v586 = vshrl.u32 %v585, 7
    %v587 = vsub.s32 %v584, %v586
    %v588 = vrot.slane %v580, %v587
    %v589 = vcombine.high %v588, %v588
    %v591 = vunpack.c.l.s4 1966171168
    %v592 = vunpack.c.0.s8 %v591
    %v593 = vlaneseq
    %v594 = vshrl.u32 %v593, 7
    %v595 = vsub.s32 %v592, %v594
    %v596 = vrot.slane %v588, %v595
    %v598 = vunpack.c.l.s4 1966171168
    %v599 = vunpack.c.0.s8 %v598
    %v600 = vlaneseq
    %v601 = vshrl.u32 %v600, 7
    %v602 = vsub.s32 %v599, %v601
    %v603 = vrot.slane %v589, %v602
    %v604 = vlaneseq
    %v605 = vshrl.u32 %v604, 7
    %v606 = vsub.s32 0, %v605
    %v607 = vrot.slane %v596, %v606
    %v608 = vlaneseq
    %v609 = vshrl.u32 %v608, 7
    %v610 = vsub.s32 0, %v609
    %v611 = vrot.slane %v603, %v610
    %v614 = vadd.f32 %v189, %v607
    %v615 = vadd.f32 %v192, %v611
    %v616 = vtanh.pop %v614
    %v617 = vtanh.pop %v615
    %v618 = vld [vmem:[%s7] sm:$0x1]
    %v620 = vlaneseq
    %v621 = vshrl.u32 %v620, 7
    %v622 = vsub.s32 0, %v621
    %v623 = vrot.slane %v618, %v622
    %v625 = vmul.f32 %v616, %v623
    %v626 = vmul.f32 %v617, %v623
    %627 = vadd.xlane.f32.xlu0 %v625
    %v628 = vpop.xlane.xlu0 %627
    %629 = vadd.xlane.f32.xlu0 %v626
    %v630 = vpop.xlane.xlu0 %629
    %v633 = vlaneseq
    %v634 = vand.u32 %v633, 127
    %v635 = vlaneseq
    %v636 = vshrl.u32 %v635, 7
    %v637 = vsub.s32 %v634, %v636
    %v638 = vrot.slane %v628, %v637
    %v639 = vlaneseq
    %v640 = vshrl.u32 %v639, 7
    %v641 = vsub.s32 %v634, %v640
    %v642 = vrot.slane %v630, %v641
    %vm643 = vcmask 1041409
    %v644 = vsel %vm643, %v642, %v638
    %vm646 = vcmask 58368
    %v647 = vsel %vm646, %v644, -inf
    %648 = vmax.xlane.f32.xlu0 %v647
    %v649 = vpop.xlane.xlu0 %648
    %v651 = vlaneseq
    %v652 = vshrl.u32 %v651, 7
    %v653 = vsub.s32 0, %v652
    %v654 = vrot.slane %v649, %v653
    %v655 = vlaneseq
    %v656 = vshrl.u32 %v655, 7
    %v657 = vsub.s32 1, %v656
    %v658 = vrot.slane %v649, %v657
    %v661 = vsub.f32 %v628, %v654
    %v662 = vsub.f32 %v630, %v658
    %v663 = vmul.f32 %v661, 1.442695
    %v664 = vpow.pop %v663
    %v665 = vmul.f32 %v662, 1.442695
    %v666 = vpow.pop %v665
    %669 = vset.pattern.permute.xlu0 0
    %670 = vperm.xlu0 %669, %v664
    %v671 = vpop.permute.xlu0 %670
    %672 = vset.pattern.permute.xlu0 0
    %673 = vperm.xlu0 %672, %v666
    %v674 = vpop.permute.xlu0 %673
    %v675 = vlaneseq
    %v676 = vshrl.u32 %v675, 7
    %v677 = vsub.s32 %v634, %v676
    %v678 = vrot.slane %v671, %v677
    %v679 = vlaneseq
    %v680 = vshrl.u32 %v679, 7
    %v681 = vsub.s32 %v634, %v680
    %v682 = vrot.slane %v674, %v681
    %v683 = vsel %vm643, %v682, %v678
    %v685 = vsel %vm646, %v683, 0.0
    %686 = vadd.xlane.f32.xlu0 %v685
    %v687 = vpop.xlane.xlu0 %686
    %v688 = vrcp.pop %v687
    %v690 = vlaneseq
    %v691 = vshrl.u32 %v690, 7
    %v692 = vsub.s32 0, %v691
    %v693 = vrot.slane %v688, %v692
    %v694 = vlaneseq
    %v695 = vshrl.u32 %v694, 7
    %v696 = vsub.s32 1, %v695
    %v697 = vrot.slane %v688, %v696
    %v700 = vmul.f32 %v664, %v693
    %v701 = vmul.f32 %v666, %v697
    %704 = vset.pattern.permute.xlu0 0
    %705 = vperm.xlu0 %704, %v700
    %v706 = vpop.permute.xlu0 %705
    %707 = vset.pattern.permute.xlu0 0
    %708 = vperm.xlu0 %707, %v701
    %v709 = vpop.permute.xlu0 %708
    %v710 = vlaneseq
    %v711 = vshrl.u32 %v710, 7
    %v712 = vsub.s32 %v634, %v711
    %v713 = vrot.slane %v706, %v712
    %v714 = vlaneseq
    %v715 = vshrl.u32 %v714, 7
    %v716 = vsub.s32 %v634, %v715
    %v717 = vrot.slane %v709, %v716
    %v718 = vsel %vm643, %v717, %v713
    %720 = vst.msk [vmem:[#allocation16] sm:$0x3] %vm646, %v718
    %v721 = vunpack.c.l.bf16 %v126
    %v722 = vunpack.c.l.bf16 %v127
    %v725 = vmul.f32 %v706, %v721
    %v726 = vmul.f32 %v709, %v722
    %v727 = vsel %vm150, %v725, 0.0
    %v728 = vrot.slane %v727, 4
    %v729 = vadd.f32 %v727, %v728
    %v730 = vrot.slane %v729, 2
    %v731 = vadd.f32 %v729, %v730
    %v732 = vrot.slane %v731, 1
    %v733 = vadd.f32 %v731, %v732
    %v734 = vsel %vm150, %v726, 0.0
    %v735 = vrot.slane %v734, 4
    %v736 = vadd.f32 %v734, %v735
    %v737 = vrot.slane %v736, 2
    %v738 = vadd.f32 %v736, %v737
    %v739 = vrot.slane %v738, 1
    %v740 = vadd.f32 %v738, %v739
    %v741 = vpack.c.bf16 %v733, %v733
    %v742 = vpack.c.bf16 %v740, %v740
    %v743 = vld [vmem:[#allocation10] sm:$0xff]
    %v744 = vld [vmem:[#allocation10 + $0x8] sm:$0xff]
    %v745 = vld [vmem:[#allocation10 + $0x10] sm:$0xff]
    %v746 = vld [vmem:[#allocation10 + $0x18] sm:$0xff]
    %v747 = vld [vmem:[#allocation10 + $0x20] sm:$0xff]
    %v748 = vld [vmem:[#allocation10 + $0x28] sm:$0xff]
    %v749 = vld [vmem:[#allocation10 + $0x30] sm:$0xff]
    %v750 = vld [vmem:[#allocation10 + $0x38] sm:$0xff]
    %v751 = vld [vmem:[#allocation11] sm:$0xff]
    %v752 = vld [vmem:[#allocation11 + $0x8] sm:$0xff]
    %v753 = vld [vmem:[#allocation11 + $0x10] sm:$0xff]
    %v754 = vld [vmem:[#allocation11 + $0x18] sm:$0xff]
    %v755 = vld [vmem:[#allocation11 + $0x20] sm:$0xff]
    %v756 = vld [vmem:[#allocation11 + $0x28] sm:$0xff]
    %v757 = vld [vmem:[#allocation11 + $0x30] sm:$0xff]
    %v758 = vld [vmem:[#allocation11 + $0x38] sm:$0xff]
    %v767 = vunpack.c.l.b16 %v751
    %v768 = vunpack.c.h.b16 %v751
    %v769 = vunpack.c.l.b16 %v752
    %v770 = vunpack.c.h.b16 %v752
    %v771 = vunpack.c.l.b16 %v753
    %v772 = vunpack.c.h.b16 %v753
    %v773 = vunpack.c.l.b16 %v754
    %v774 = vunpack.c.h.b16 %v754
    %v775 = vunpack.c.l.b16 %v755
    %v776 = vunpack.c.h.b16 %v755
    %v777 = vunpack.c.l.b16 %v756
    %v778 = vunpack.c.h.b16 %v756
    %v779 = vunpack.c.l.b16 %v757
    %v780 = vunpack.c.h.b16 %v757
    %v781 = vunpack.c.l.b16 %v758
    %v782 = vunpack.c.h.b16 %v758
    %v783 = vpack.c.b16 %v771, %v767
    %v784 = vpack.c.b16 %v772, %v768
    %v785 = vpack.c.b16 %v773, %v769
    %v786 = vpack.c.b16 %v774, %v770
    %v787 = vpack.c.b16 %v779, %v775
    %v788 = vpack.c.b16 %v780, %v776
    %v789 = vpack.c.b16 %v781, %v777
    %v790 = vpack.c.b16 %v782, %v778
    %v800 = vsel %vm150, %v128, 0
    %802 = vmatprep.subr.bf16.mxu0 %v784
    %803 = vmatpush1.bf16.msra.mxu0 %v783
    %804 = vmatprep.subr.bf16.mxu0 %v788
    %805 = vmatpush1.bf16.msra.mxu0 %v787
    %806 = vmatprep.subr.bf16.mxu0 0
    %807 = vmatpush1.bf16.msra.mxu0 0
    %808 = vmatprep.subr.bf16.mxu0 0
    %809 = vmatpush1.bf16.msra.mxu0 0
    %810 = vmatprep.subr.bf16.mxu0 0
    %811 = vmatpush1.bf16.msra.mxu0 0
    %812 = vmatprep.subr.bf16.mxu0 0
    %813 = vmatpush1.bf16.msra.mxu0 0
    %814 = vmatprep.subr.bf16.mxu0 0
    %815 = vmatpush1.bf16.msra.mxu0 0
    %816 = vmatprep.subr.bf16.mxu0 0
    %817 = vmatpush1.bf16.msra.mxu0 0
    %818 = vmatprep.subr.bf16.mxu0 0
    %819 = vmatpush1.bf16.msra.mxu0 0
    %820 = vmatprep.subr.bf16.mxu0 0
    %821 = vmatpush1.bf16.msra.mxu0 0
    %822 = vmatprep.subr.bf16.mxu0 0
    %823 = vmatpush1.bf16.msra.mxu0 0
    %824 = vmatprep.subr.bf16.mxu0 0
    %825 = vmatpush1.bf16.msra.mxu0 0
    %826 = vmatprep.subr.bf16.mxu0 0
    %827 = vmatpush1.bf16.msra.mxu0 0
    %828 = vmatprep.subr.bf16.mxu0 0
    %829 = vmatpush1.bf16.msra.mxu0 0
    %830 = vmatprep.subr.bf16.mxu0 0
    %831 = vmatpush1.bf16.msra.mxu0 0
    %832 = vmatprep.subr.bf16.mxu0 0
    %833 = vmatpush1.bf16.msra.mxu0 0
    %834 = vmatprep.mubr.bf16.mxu0 0
    %835 = vmatmul.mubr.bf16.gmra.mrb[0].mxu0 %v800
    %v836 = vpop.f32.mrb[0].mxu0
    %v837 = vadd.f32 0.0, %v836
    %v838 = vpop.f32.mrb[0].mxu0
    %v839 = vadd.f32 0.0, %v838
    %v840 = vpop.f32.mrb[0].mxu0
    %v841 = vpop.f32.mrb[0].mxu0
    %842 = vdwg.mxu0
    %843 = vmatprep.subr.bf16.mxu0 %v786
    %844 = vmatpush1.bf16.msra.mxu0 %v785
    %845 = vmatprep.subr.bf16.mxu0 %v790
    %846 = vmatpush1.bf16.msra.mxu0 %v789
    %847 = vmatprep.subr.bf16.mxu0 0
    %848 = vmatpush1.bf16.msra.mxu0 0
    %849 = vmatprep.subr.bf16.mxu0 0
    %850 = vmatpush1.bf16.msra.mxu0 0
    %851 = vmatprep.subr.bf16.mxu0 0
    %852 = vmatpush1.bf16.msra.mxu0 0
    %853 = vmatprep.subr.bf16.mxu0 0
    %854 = vmatpush1.bf16.msra.mxu0 0
    %855 = vmatprep.subr.bf16.mxu0 0
    %856 = vmatpush1.bf16.msra.mxu0 0
    %857 = vmatprep.subr.bf16.mxu0 0
    %858 = vmatpush1.bf16.msra.mxu0 0
    %859 = vmatprep.subr.bf16.mxu0 0
    %860 = vmatpush1.bf16.msra.mxu0 0
    %861 = vmatprep.subr.bf16.mxu0 0
    %862 = vmatpush1.bf16.msra.mxu0 0
    %863 = vmatprep.subr.bf16.mxu0 0
    %864 = vmatpush1.bf16.msra.mxu0 0
    %865 = vmatprep.subr.bf16.mxu0 0
    %866 = vmatpush1.bf16.msra.mxu0 0
    %867 = vmatprep.subr.bf16.mxu0 0
    %868 = vmatpush1.bf16.msra.mxu0 0
    %869 = vmatprep.subr.bf16.mxu0 0
    %870 = vmatpush1.bf16.msra.mxu0 0
    %871 = vmatprep.subr.bf16.mxu0 0
    %872 = vmatpush1.bf16.msra.mxu0 0
    %873 = vmatprep.subr.bf16.mxu0 0
    %874 = vmatpush1.bf16.msra.mxu0 0
    %875 = vmatprep.mubr.bf16.mxu0 0
    %876 = vmatmul.mubr.bf16.gmra.mrb[0].mxu0 %v800
    %v877 = vpop.f32.mrb[0].mxu0
    %v878 = vadd.f32 0.0, %v877
    %v879 = vpop.f32.mrb[0].mxu0
    %v880 = vadd.f32 0.0, %v879
    %v881 = vpop.f32.mrb[0].mxu0
    %v882 = vpop.f32.mrb[0].mxu0
    %883 = vdwg.mxu0
    %v886 = vunpack.c.l.b16 %v741
    %v887 = vunpack.c.l.b16 %v742
    %v888 = vsel %vm643, %v887, %v886
    %v889 = vpack.c.b16 %v888, %v888
    %v898 = vunpack.c.l.b16 %v743
    %v899 = vunpack.c.h.b16 %v743
    %v900 = vunpack.c.l.b16 %v744
    %v901 = vunpack.c.h.b16 %v744
    %v902 = vunpack.c.l.b16 %v745
    %v903 = vunpack.c.h.b16 %v745
    %v904 = vunpack.c.l.b16 %v746
    %v905 = vunpack.c.h.b16 %v746
    %v906 = vunpack.c.l.b16 %v747
    %v907 = vunpack.c.h.b16 %v747
    %v908 = vunpack.c.l.b16 %v748
    %v909 = vunpack.c.h.b16 %v748
    %v910 = vunpack.c.l.b16 %v749
    %v911 = vunpack.c.h.b16 %v749
    %v912 = vunpack.c.l.b16 %v750
    %v913 = vunpack.c.h.b16 %v750
    %v914 = vpack.c.b16 %v902, %v898
    %v915 = vpack.c.b16 %v903, %v899
    %v916 = vpack.c.b16 %v904, %v900
    %v917 = vpack.c.b16 %v905, %v901
    %v918 = vpack.c.b16 %v910, %v906
    %v919 = vpack.c.b16 %v911, %v907
    %v920 = vpack.c.b16 %v912, %v908
    %v921 = vpack.c.b16 %v913, %v909
    %v931 = vsel %vm150, %v889, 0
    %933 = vmatprep.subr.bf16.mxu0 %v915
    %934 = vmatpush1.bf16.msra.mxu0 %v914
    %935 = vmatprep.subr.bf16.mxu0 %v919
    %936 = vmatpush1.bf16.msra.mxu0 %v918
    %937 = vmatprep.subr.bf16.mxu0 0
    %938 = vmatpush1.bf16.msra.mxu0 0
    %939 = vmatprep.subr.bf16.mxu0 0
    %940 = vmatpush1.bf16.msra.mxu0 0
    %941 = vmatprep.subr.bf16.mxu0 0
    %942 = vmatpush1.bf16.msra.mxu0 0
    %943 = vmatprep.subr.bf16.mxu0 0
    %944 = vmatpush1.bf16.msra.mxu0 0
    %945 = vmatprep.subr.bf16.mxu0 0
    %946 = vmatpush1.bf16.msra.mxu0 0
    %947 = vmatprep.subr.bf16.mxu0 0
    %948 = vmatpush1.bf16.msra.mxu0 0
    %949 = vmatprep.subr.bf16.mxu0 0
    %950 = vmatpush1.bf16.msra.mxu0 0
    %951 = vmatprep.subr.bf16.mxu0 0
    %952 = vmatpush1.bf16.msra.mxu0 0
    %953 = vmatprep.subr.bf16.mxu0 0
    %954 = vmatpush1.bf16.msra.mxu0 0
    %955 = vmatprep.subr.bf16.mxu0 0
    %956 = vmatpush1.bf16.msra.mxu0 0
    %957 = vmatprep.subr.bf16.mxu0 0
    %958 = vmatpush1.bf16.msra.mxu0 0
    %959 = vmatprep.subr.bf16.mxu0 0
    %960 = vmatpush1.bf16.msra.mxu0 0
    %961 = vmatprep.subr.bf16.mxu0 0
    %962 = vmatpush1.bf16.msra.mxu0 0
    %963 = vmatprep.subr.bf16.mxu0 0
    %964 = vmatpush1.bf16.msra.mxu0 0
    %965 = vmatprep.mubr.bf16.mxu0 0
    %966 = vmatmul.mubr.bf16.gmra.mrb[0].mxu0 %v931
    %v967 = vpop.f32.mrb[0].mxu0
    %v968 = vadd.f32 %v837, %v967
    %v969 = vpop.f32.mrb[0].mxu0
    %v970 = vadd.f32 %v839, %v969
    %v971 = vpop.f32.mrb[0].mxu0
    %v972 = vpop.f32.mrb[0].mxu0
    %973 = vdwg.mxu0
    %974 = vmatprep.subr.bf16.mxu0 %v917
    %975 = vmatpush1.bf16.msra.mxu0 %v916
    %976 = vmatprep.subr.bf16.mxu0 %v921
    %977 = vmatpush1.bf16.msra.mxu0 %v920
    %978 = vmatprep.subr.bf16.mxu0 0
    %979 = vmatpush1.bf16.msra.mxu0 0
    %980 = vmatprep.subr.bf16.mxu0 0
    %981 = vmatpush1.bf16.msra.mxu0 0
    %982 = vmatprep.subr.bf16.mxu0 0
    %983 = vmatpush1.bf16.msra.mxu0 0
    %984 = vmatprep.subr.bf16.mxu0 0
    %985 = vmatpush1.bf16.msra.mxu0 0
    %986 = vmatprep.subr.bf16.mxu0 0
    %987 = vmatpush1.bf16.msra.mxu0 0
    %988 = vmatprep.subr.bf16.mxu0 0
    %989 = vmatpush1.bf16.msra.mxu0 0
    %990 = vmatprep.subr.bf16.mxu0 0
    %991 = vmatpush1.bf16.msra.mxu0 0
    %992 = vmatprep.subr.bf16.mxu0 0
    %993 = vmatpush1.bf16.msra.mxu0 0
    %994 = vmatprep.subr.bf16.mxu0 0
    %995 = vmatpush1.bf16.msra.mxu0 0
    %996 = vmatprep.subr.bf16.mxu0 0
    %997 = vmatpush1.bf16.msra.mxu0 0
    %998 = vmatprep.subr.bf16.mxu0 0
    %999 = vmatpush1.bf16.msra.mxu0 0
    %1000 = vmatprep.subr.bf16.mxu0 0
    %1001 = vmatpush1.bf16.msra.mxu0 0
    %1002 = vmatprep.subr.bf16.mxu0 0
    %1003 = vmatpush1.bf16.msra.mxu0 0
    %1004 = vmatprep.subr.bf16.mxu0 0
    %1005 = vmatpush1.bf16.msra.mxu0 0
    %1006 = vmatprep.mubr.bf16.mxu0 0
    %1007 = vmatmul.mubr.bf16.gmra.mrb[0].mxu0 %v931
    %v1008 = vpop.f32.mrb[0].mxu0
    %v1009 = vadd.f32 %v878, %v1008
    %v1010 = vpop.f32.mrb[0].mxu0
    %v1011 = vadd.f32 %v880, %v1010
    %v1012 = vpop.f32.mrb[0].mxu0
    %v1013 = vpop.f32.mrb[0].mxu0
    %1014 = vdwg.mxu0
    %v1015 = vadd.f32 %v968, %v488
    %v1016 = vadd.f32 %v970, %v527
    %v1017 = vadd.f32 %v1009, %v529
    %v1018 = vadd.f32 %v1011, %v568
    %v1019 = vld [vmem:[%s10] sm:$0xf]
    %v1021 = vlaneseq
    %v1022 = vshrl.u32 %v1021, 7
    %v1023 = vsub.s32 0, %v1022
    %v1024 = vrot.slane %v1019, %v1023
    %v1025 = vlaneseq
    %v1026 = vshrl.u32 %v1025, 7
    %v1027 = vsub.s32 1, %v1026
    %v1028 = vrot.slane %v1019, %v1027
    %v1029 = vlaneseq
    %v1030 = vshrl.u32 %v1029, 7
    %v1031 = vsub.s32 2, %v1030
    %v1032 = vrot.slane %v1019, %v1031
    %v1033 = vlaneseq
    %v1034 = vshrl.u32 %v1033, 7
    %v1035 = vsub.s32 3, %v1034
    %v1036 = vrot.slane %v1019, %v1035
    %v1041 = vadd.f32 %v1015, %v1024
    %v1042 = vadd.f32 %v1016, %v1028
    %v1043 = vadd.f32 %v1017, %v1032
    %v1044 = vadd.f32 %v1018, %v1036
    %v1045 = vxor.u32 %v1041, 2147483648
    %v1046 = vmul.f32 %v1045, 1.442695
    %v1047 = vpow.pop %v1046
    %v1048 = vadd.f32 %v1047, 1.0
    %v1049 = vrcp.pop %v1048
    %v1050 = vmul.f32 1.0, %v1049
    %v1051 = vxor.u32 %v1042, 2147483648
    %v1052 = vmul.f32 %v1051, 1.442695
    %v1053 = vpow.pop %v1052
    %v1054 = vadd.f32 %v1053, 1.0
    %v1055 = vrcp.pop %v1054
    %v1056 = vmul.f32 1.0, %v1055
    %v1057 = vtanh.pop %v1043
    %v1058 = vxor.u32 %v1044, 2147483648
    %v1059 = vmul.f32 %v1058, 1.442695
    %v1060 = vpow.pop %v1059
    %v1061 = vadd.f32 %v1060, 1.0
    %v1062 = vrcp.pop %v1061
    %v1063 = vmul.f32 1.0, %v1062
    %v1064 = vmul.f32 %v1056, %v125
    %v1065 = vmul.f32 %v1050, %v1057
    %v1066 = vadd.f32 %v1064, %v1065
    %v1067 = vtanh.pop %v1066
    %v1068 = vmul.f32 %v1063, %v1067
    %1069 = vst [vmem:[#allocation13] sm:$0x3] %v1068
    %1070 = vst [vmem:[#allocation14] sm:$0x3] %v1066
    // Predicated region
    $region70: #{tpu_custom_call.1} parent=1 // pred_check
      _
    $region71: #{tpu_custom_call.1} parent=1 // pred_check_branch
      %1072 = sbr.rel (0) target = $region73
    $region72: #{tpu_custom_call.1} parent=1 // pred_region
      %s1074 = ssub.s32 32, 32
      %1075 = vsyncadd [#allocation4], %s1074
      %s1077 = sshll.u32 [#allocation13], 4
      %s1078 = int_to_ptr.vmem [resolvable:$true] %s1077
      %1080 = dma.vmem_to_hbm [thread:$0]  %s1078, 32, %s11, [#allocation4]
    $region73: #{tpu_custom_call.1} parent=1 // pred_fallthru
      _
    // Predicated region
    $region74: #{tpu_custom_call.1} parent=1 // pred_check
      _
    $region75: #{tpu_custom_call.1} parent=1 // pred_check_branch
      %1082 = sbr.rel (0) target = $region77
    $region76: #{tpu_custom_call.1} parent=1 // pred_region
      %s1084 = ssub.s32 32, 32
      %1085 = vsyncadd [#allocation15], %s1084
      %s1087 = sshll.u32 [#allocation14], 4
      %s1088 = int_to_ptr.vmem [resolvable:$true] %s1087
      %1090 = dma.vmem_to_hbm [thread:$0]  %s1088, 32, %s12, [#allocation15]
    $region77: #{tpu_custom_call.1} parent=1 // pred_fallthru
      _
    // Predicated region
    $region78: #{tpu_custom_call.1} parent=1 // pred_check
      _
    $region79: #{tpu_custom_call.1} parent=1 // pred_check_branch
      %1092 = sbr.rel (0) target = $region81
    $region80: #{tpu_custom_call.1} parent=1 // pred_region
      %s1094 = ssub.s32 32, 32
      %1095 = vsyncadd [#allocation15], %s1094
      %s1097 = sshll.u32 [#allocation16], 4
      %s1098 = int_to_ptr.vmem [resolvable:$true] %s1097
      %1100 = dma.vmem_to_hbm [thread:$0]  %s1098, 32, %s13, [#allocation15]
    $region81: #{tpu_custom_call.1} parent=1 // pred_fallthru
      _
    // Predicated region
    $region82: #{tpu_custom_call.1} parent=1 // pred_check
      _
    $region83: #{tpu_custom_call.1} parent=1 // pred_check_branch
      %1102 = sbr.rel (0) target = $region85
    $region84: #{tpu_custom_call.1} parent=1 // pred_region
      %1103 = dma.done [#allocation4], 32
    $region85: #{tpu_custom_call.1} parent=1 // pred_fallthru
      _
    // Predicated region
    $region86: #{tpu_custom_call.1} parent=1 // pred_check
      _
    $region87: #{tpu_custom_call.1} parent=1 // pred_check_branch
      %1105 = sbr.rel (0) target = $region89
    $region88: #{tpu_custom_call.1} parent=1 // pred_region
      %1106 = dma.done [#allocation15], 32
    $region89: #{tpu_custom_call.1} parent=1 // pred_fallthru
      _
    // Predicated region
    $region90: #{tpu_custom_call.1} parent=1 // pred_check
      _
    $region91: #{tpu_custom_call.1} parent=1 // pred_check_branch
      %1108 = sbr.rel (0) target = $region93
    $region92: #{tpu_custom_call.1} parent=1 // pred_region
      %1109 = dma.done [#allocation15], 32
    $region93: #{tpu_custom_call.1} parent=1 // pred_fallthru
      _
    %1110 = vsyncpa [#allocation3], 1
    %1111 = vsyncpa [#allocation6], 1
    %1112 = vsyncpa [#allocation9], 1
    %1113 = vsyncpa [#allocation12], 1
    %1114 = vsyncpa [#allocation4], 1
    %1115 = vsyncpa [#allocation15], 1

</llo_original>
